<compile_context>
chip_gen: v5e
topology: v5e:2x2
jax: 0.10.0
libtpu: 0.0.40
codegen_flags: <defaults>
</compile_context>

<pallas_src>
import functools

import jax
import jax.numpy as jnp
import numpy as np
from jax.experimental import pallas as pl
from jax.experimental.pallas import tpu as pltpu

K = 11          # conv kernel size used everywhere in ConvStem / PA
PAD = K // 2    # = 5
HALO = 8        # sublane-aligned zero-halo size used for in-kernel padding


# --------------------------------------------------------------------------
# Fused Pallas kernel (one batch element per grid step)
# --------------------------------------------------------------------------
def _conv_stem_kernel(xp_ref, w1_ref, s1_ref, b1_ref, sel1_ref,
                      w2_ref, s2_ref, b2_ref, sel2_ref,
                      w3_ref, b3_ref, wpa_ref, bpa_ref, lng_ref, lnb_ref,
                      o_ref, *, L0, L1, L2):
    f32 = jnp.float32
    C1 = w1_ref.shape[1]          # stem mid channels (= out_ch // 2)
    C2 = w3_ref.shape[1]          # stem out channels (= out_ch)

    # ---- conv1 (k=11, stride 2, C_in=1) + folded BN1 + ReLU ----------------
    # Full-resolution (stride-1) conv as K broadcast-FMA taps on the VPU,
    # then stride-2 subsampling via a 0/1 selection matmul.  xp_ref already
    # carries the zero padding (left PAD, right padded to a multiple of 8).
    xv = xp_ref[...]                                          # (Lp, 1)
    acc1 = jnp.zeros((L0, C1), f32)
    for k in range(K):
        acc1 = acc1 + xv[k:k + L0, :] * w1_ref[k:k + 1, :]    # (L0,1)*(1,C1)
    h1 = jnp.dot(sel1_ref[...], acc1, preferred_element_type=f32)   # (L1, C1)
    h1 = jnp.maximum(h1 * s1_ref[...] + b1_ref[...], 0.0)

    # ---- conv2 (k=11, stride 2) + folded BN2 + ReLU ------------------------
    # K accumulating (L1, C1) x (C1, C2) MXU matmuls against a vreg-resident,
    # zero-halo-padded copy of h1; concat boundaries are 8-row aligned.
    h1p = jnp.concatenate(
        [jnp.zeros((HALO, C1), f32), h1, jnp.zeros((HALO, C1), f32)], axis=0)
    acc2 = jnp.zeros((L1, C2), f32)
    for k in range(K):
        tap = h1p[k + HALO - PAD:k + HALO - PAD + L1, :]      # rows h1pad[l + k]
        acc2 = acc2 + jnp.dot(tap, w2_ref[k * C1:(k + 1) * C1, :],
                              preferred_element_type=f32)
    h2 = jnp.dot(sel2_ref[...], acc2, preferred_element_type=f32)   # (L2, C2)
    h2 = jnp.maximum(h2 * s2_ref[...] + b2_ref[...], 0.0)

    # ---- 1x1 conv + bias ---------------------------------------------------
    z = jnp.dot(h2, w3_ref[...], preferred_element_type=f32) + b3_ref[...]

    # ---- PA: x * sigmoid(depthwise conv k=11, pad 5) -----------------------
    zp = jnp.concatenate(
        [jnp.zeros((HALO, C2), f32), z, jnp.zeros((HALO, C2), f32)], axis=0)
    accp = jnp.zeros((L2, C2), f32)
    for k in range(K):
        accp = accp + (zp[k + HALO - PAD:k + HALO - PAD + L2, :]
                       * wpa_ref[k:k + 1, :])
    pa = accp + bpa_ref[...]
    gate = pl.reciprocal(1.0 + jnp.exp(-pa), approx=True)     # sigmoid on EUP
    g = z * gate

    # ---- LayerNorm over channels (eps = 1e-6) ------------------------------
    mu = jnp.mean(g, axis=-1, keepdims=True)
    xc = g - mu
    var = jnp.mean(xc * xc, axis=-1, keepdims=True)
    y = xc * jax.lax.rsqrt(var + 1e-6)
    o_ref[...] = (y * lng_ref[...] + lnb_ref[...]).astype(o_ref.dtype)


# --------------------------------------------------------------------------
# Wrapper
# --------------------------------------------------------------------------
def _round_up(x, m):
    return (x + m - 1) // m * m


def conv_stem_forward(x_ncl, p, patch_size=4):
    B, C_in, L0 = x_ncl.shape
    assert C_in == 1, "kernel is specialized to the module default in_ch=1"
    L1, L2 = L0 // 2, L0 // 4
    C1 = p["w1"].shape[1]
    C2 = p["w3"].shape[1]

    # NCL -> NLC, zero-pad the length axis (left PAD, right up to a multiple
    # of 8 large enough to cover every conv tap).
    x_nlc = jnp.transpose(x_ncl, (0, 2, 1)).astype(jnp.float32)
    Lp = _round_up(L0 + 2 * PAD, 8)
    xp = jnp.pad(x_nlc, ((0, 0), (PAD, Lp - L0 - PAD), (0, 0)))

    kernel = functools.partial(_conv_stem_kernel, L0=L0, L1=L1, L2=L2)
    wmap = lambda b: (0, 0)   # shared (non-batched) operands

    out = pl.pallas_call(
        kernel,
        out_shape=jax.ShapeDtypeStruct((B, L2, C2), jnp.float32),
        grid=(B,),
        in_specs=[
            pl.BlockSpec((None, Lp, 1), lambda b: (b, 0, 0)),   # padded input
            pl.BlockSpec((K, C1), wmap),                        # conv1 weight (K, C1)
            pl.BlockSpec((1, C1), wmap),                        # BN1 scale (folded)
            pl.BlockSpec((1, C1), wmap),                        # BN1 bias  (folded)
            pl.BlockSpec((L1, L0), wmap),                       # stride-2 select #1
            pl.BlockSpec((K * C1, C2), wmap),                   # conv2 weight (K*C1, C2)
            pl.BlockSpec((1, C2), wmap),                        # BN2 scale (folded)
            pl.BlockSpec((1, C2), wmap),                        # BN2 bias  (folded)
            pl.BlockSpec((L2, L1), wmap),                       # stride-2 select #2
            pl.BlockSpec((C2, C2), wmap),                       # 1x1 conv weight
            pl.BlockSpec((1, C2), wmap),                        # 1x1 conv bias
            pl.BlockSpec((K, C2), wmap),                        # PA depthwise weight
            pl.BlockSpec((1, C2), wmap),                        # PA bias
            pl.BlockSpec((1, C2), wmap),                        # LN gamma
            pl.BlockSpec((1, C2), wmap),                        # LN beta
        ],
        out_specs=pl.BlockSpec((None, L2, C2), lambda b: (b, 0, 0)),
        compiler_params=pltpu.CompilerParams(
            dimension_semantics=("parallel",)),
    )(xp, p["w1"], p["s1"], p["b1"], p["sel1"],
      p["w2"], p["s2"], p["b2"], p["sel2"],
      p["w3"], p["b3"], p["wpa"], p["bpa"], p["ln_g"], p["ln_b"])
    return out, L0 // patch_size


# --------------------------------------------------------------------------
# Pure-JAX reference (mirrors PyTorch forward, eval-mode BN)
# --------------------------------------------------------------------------
def reference_forward(x, P, patch_size=4):
    def conv1d(h, w, stride, pad, groups=1):
        return jax.lax.conv_general_dilated(
            h, w, (stride,), [(pad, pad)],
            dimension_numbers=("NCH", "OIH", "NCH"),
            feature_group_count=groups)

    def bn(h, g, b, rm, rv, eps=1e-5):
        return ((h - rm[None, :, None]) / jnp.sqrt(rv + eps)[None, :, None]
                * g[None, :, None] + b[None, :, None])

    h = conv1d(x, P["W1"], 2, PAD)
    h = jax.nn.relu(bn(h, P["bn1_g"], P["bn1_b"], P["bn1_rm"], P["bn1_rv"]))
    h = conv1d(h, P["W2"], 2, PAD)
    h = jax.nn.relu(bn(h, P["bn2_g"], P["bn2_b"], P["bn2_rm"], P["bn2_rv"]))
    z = conv1d(h, P["W3"], 1, 0) + P["b3"][None, :, None]
    pa = conv1d(z, P["Wpa"], 1, PAD, groups=z.shape[1]) + P["bpa"][None, :, None]
    g = z * jax.nn.sigmoid(pa)
    g = jnp.transpose(g, (0, 2, 1))
    mu = jnp.mean(g, axis=-1, keepdims=True)
    var = jnp.mean((g - mu) ** 2, axis=-1, keepdims=True)
    out = (g - mu) / jnp.sqrt(var + 1e-6) * P["ln_g"] + P["ln_b"]
    return out, x.shape[2] // patch_size


# --------------------------------------------------------------------------
if __name__ == "__main__":
    B, IN_CH, L_IN = 2, 1, 64
    OUT_CH, PATCH = 32, 4
    C_MID = OUT_CH // 2

    keys = jax.random.split(jax.random.PRNGKey(0), 17)

    def he(k, shape, fan_in):
        return jax.random.normal(k, shape, jnp.float32) * (2.0 / fan_in) ** 0.5

    x = jax.random.normal(keys[0], (B, IN_CH, L_IN), jnp.float32)

    P = {
        "W1": he(keys[1], (C_MID, IN_CH, K), IN_CH * K),
        "W2": he(keys[2], (OUT_CH, C_MID, K), C_MID * K),
        "W3": he(keys[3], (OUT_CH, OUT_CH, 1), OUT_CH),
        "b3": 0.1 * jax.random.normal(keys[4], (OUT_CH,), jnp.float32),
        "Wpa": he(keys[5], (OUT_CH, 1, K), K),
        "bpa": 0.1 * jax.random.normal(keys[6], (OUT_CH,), jnp.float32),
        "bn1_g": 1.0 + 0.1 * jax.random.normal(keys[7], (C_MID,), jnp.float32),
        "bn1_b": 0.1 * jax.random.normal(keys[8], (C_MID,), jnp.float32),
        "bn1_rm": 0.1 * jax.random.normal(keys[9], (C_MID,), jnp.float32),
        "bn1_rv": 1.0 + 0.1 * jnp.abs(jax.random.normal(keys[10], (C_MID,), jnp.float32)),
        "bn2_g": 1.0 + 0.1 * jax.random.normal(keys[11], (OUT_CH,), jnp.float32),
        "bn2_b": 0.1 * jax.random.normal(keys[12], (OUT_CH,), jnp.float32),
        "bn2_rm": 0.1 * jax.random.normal(keys[13], (OUT_CH,), jnp.float32),
        "bn2_rv": 1.0 + 0.1 * jnp.abs(jax.random.normal(keys[14], (OUT_CH,), jnp.float32)),
        "ln_g": 1.0 + 0.1 * jax.random.normal(keys[15], (OUT_CH,), jnp.float32),
        "ln_b": 0.1 * jax.random.normal(keys[16], (OUT_CH,), jnp.float32),
    }

    # ---- fold parameters into kernel-friendly form ----
    def fold_bn(g, b, rm, rv, eps=1e-5):
        s = g / jnp.sqrt(rv + eps)
        return s.reshape(1, -1), (b - rm * s).reshape(1, -1)

    s1, b1 = fold_bn(P["bn1_g"], P["bn1_b"], P["bn1_rm"], P["bn1_rv"])
    s2, b2 = fold_bn(P["bn2_g"], P["bn2_b"], P["bn2_rm"], P["bn2_rv"])

    L1, L2 = L_IN // 2, L_IN // 4
    sel1 = np.zeros((L1, L_IN), np.float32)      # picks rows 0,2,4,... (stride 2)
    sel1[np.arange(L1), 2 * np.arange(L1)] = 1.0
    sel2 = np.zeros((L2, L1), np.float32)
    sel2[np.arange(L2), 2 * np.arange(L2)] = 1.0

    kernel_params = {
        # conv1 weight (C_out, 1, K) -> (K, C_out)
        "w1": jnp.transpose(P["W1"][:, 0, :], (1, 0)),
        "s1": s1, "b1": b1, "sel1": jnp.asarray(sel1),
        # conv2 weight (C_out, C_in, K) -> rows [k*C_in:(k+1)*C_in] = W2[:, :, k].T
        "w2": jnp.transpose(P["W2"], (2, 1, 0)).reshape(K * C_MID, OUT_CH),
        "s2": s2, "b2": b2, "sel2": jnp.asarray(sel2),
        "w3": P["W3"][:, :, 0].T,                 # (C_in, C_out)
        "b3": P["b3"].reshape(1, -1),
        "wpa": P["Wpa"][:, 0, :].T,               # (K, C)
        "bpa": P["bpa"].reshape(1, -1),
        "ln_g": P["ln_g"].reshape(1, -1),
        "ln_b": P["ln_b"].reshape(1, -1),
    }

    out, L_ret = conv_stem_forward(x, kernel_params, patch_size=PATCH)
    out = jax.block_until_ready(out)

    ref, L_ref = reference_forward(x, P, patch_size=PATCH)
    ref = jax.block_until_ready(ref)

    assert out.shape == (B, L_IN // PATCH, OUT_CH), out.shape
    assert L_ret == L_ref == L_IN // PATCH
    # Tolerance tightened 2x vs. previous version; residual slack is for TPU
    # default matmul precision (bf16 MXU passes) on both paths, not the kernel.
    err = float(np.max(np.abs(np.asarray(out) - np.asarray(ref))))
    assert np.allclose(np.asarray(out), np.asarray(ref), rtol=1e-2, atol=1e-2), (
        "mismatch vs reference, max abs err = %g" % err)

    print("KERNEL_OK")
</pallas_src>

<mosaic_0001>
module attributes {stable_mosaic.version = 11 : i64} {
  func.func @_conv_stem_kernel(%arg0: i32, %arg1: memref<1x80x1xf32, #tpu.memory_space<vmem>>, %arg2: memref<11x16xf32, #tpu.memory_space<vmem>>, %arg3: memref<1x16xf32, #tpu.memory_space<vmem>>, %arg4: memref<1x16xf32, #tpu.memory_space<vmem>>, %arg5: memref<32x64xf32, #tpu.memory_space<vmem>>, %arg6: memref<176x32xf32, #tpu.memory_space<vmem>>, %arg7: memref<1x32xf32, #tpu.memory_space<vmem>>, %arg8: memref<1x32xf32, #tpu.memory_space<vmem>>, %arg9: memref<16x32xf32, #tpu.memory_space<vmem>>, %arg10: memref<32x32xf32, #tpu.memory_space<vmem>>, %arg11: memref<1x32xf32, #tpu.memory_space<vmem>>, %arg12: memref<11x32xf32, #tpu.memory_space<vmem>>, %arg13: memref<1x32xf32, #tpu.memory_space<vmem>>, %arg14: memref<1x32xf32, #tpu.memory_space<vmem>>, %arg15: memref<1x32xf32, #tpu.memory_space<vmem>>, %arg16: memref<1x16x32xf32, #tpu.memory_space<vmem>>) attributes {dimension_semantics = [#tpu.dimension_semantics<parallel>], iteration_bounds = array<i64: 2>, scalar_prefetch = 0 : i64, scratch_operands = 0 : i64, tpu.core_type = #tpu.core_type<tc>, window_params = [{transform_indices = @transform_0, window_bounds = array<i64: 1, 80, 1>}, {pipeline_mode = #tpu.pipeline_mode<synchronous>, transform_indices = @transform_1, window_bounds = array<i64: 11, 16>}, {pipeline_mode = #tpu.pipeline_mode<synchronous>, transform_indices = @transform_2, window_bounds = array<i64: 1, 16>}, {pipeline_mode = #tpu.pipeline_mode<synchronous>, transform_indices = @transform_3, window_bounds = array<i64: 1, 16>}, {pipeline_mode = #tpu.pipeline_mode<synchronous>, transform_indices = @transform_4, window_bounds = array<i64: 32, 64>}, {pipeline_mode = #tpu.pipeline_mode<synchronous>, transform_indices = @transform_5, window_bounds = array<i64: 176, 32>}, {pipeline_mode = #tpu.pipeline_mode<synchronous>, transform_indices = @transform_6, window_bounds = array<i64: 1, 32>}, {pipeline_mode = #tpu.pipeline_mode<synchronous>, transform_indices = @transform_7, window_bounds = array<i64: 1, 32>}, {pipeline_mode = #tpu.pipeline_mode<synchronous>, transform_indices = @transform_8, window_bounds = array<i64: 16, 32>}, {pipeline_mode = #tpu.pipeline_mode<synchronous>, transform_indices = @transform_9, window_bounds = array<i64: 32, 32>}, {pipeline_mode = #tpu.pipeline_mode<synchronous>, transform_indices = @transform_10, window_bounds = array<i64: 1, 32>}, {pipeline_mode = #tpu.pipeline_mode<synchronous>, transform_indices = @transform_11, window_bounds = array<i64: 11, 32>}, {pipeline_mode = #tpu.pipeline_mode<synchronous>, transform_indices = @transform_12, window_bounds = array<i64: 1, 32>}, {pipeline_mode = #tpu.pipeline_mode<synchronous>, transform_indices = @transform_13, window_bounds = array<i64: 1, 32>}, {pipeline_mode = #tpu.pipeline_mode<synchronous>, transform_indices = @transform_14, window_bounds = array<i64: 1, 32>}, {transform_indices = @transform_15, window_bounds = array<i64: 1, 16, 32>}]} {
    %c0 = arith.constant 0 : index
    %c0_0 = arith.constant 0 : index
    %c0_1 = arith.constant 0 : index
    %0 = vector.load %arg1[%c0, %c0_0, %c0_1] : memref<1x80x1xf32, #tpu.memory_space<vmem>>, vector<1x80x1xf32>
    %1 = vector.shape_cast %0 : vector<1x80x1xf32> to vector<80x1xf32>
    %cst = arith.constant 0.000000e+00 : f32
    %2 = vector.broadcast %cst : f32 to vector<64x16xf32>
    %3 = vector.extract_strided_slice %1 {offsets = [0, 0], sizes = [64, 1], strides = [1, 1]} : vector<80x1xf32> to vector<64x1xf32>
    %c0_2 = arith.constant 0 : index
    %c0_3 = arith.constant 0 : index
    %4 = vector.load %arg2[%c0_2, %c0_3] : memref<11x16xf32, #tpu.memory_space<vmem>>, vector<1x16xf32>
    %5 = vector.broadcast %3 : vector<64x1xf32> to vector<64x16xf32>
    %6 = vector.broadcast %4 : vector<1x16xf32> to vector<64x16xf32>
    %7 = arith.mulf %5, %6 : vector<64x16xf32>
    %8 = arith.addf %2, %7 : vector<64x16xf32>
    %9 = vector.extract_strided_slice %1 {offsets = [1, 0], sizes = [64, 1], strides = [1, 1]} : vector<80x1xf32> to vector<64x1xf32>
    %c1 = arith.constant 1 : index
    %c0_4 = arith.constant 0 : index
    %10 = vector.load %arg2[%c1, %c0_4] : memref<11x16xf32, #tpu.memory_space<vmem>>, vector<1x16xf32>
    %11 = vector.broadcast %9 : vector<64x1xf32> to vector<64x16xf32>
    %12 = vector.broadcast %10 : vector<1x16xf32> to vector<64x16xf32>
    %13 = arith.mulf %11, %12 : vector<64x16xf32>
    %14 = arith.addf %8, %13 : vector<64x16xf32>
    %15 = vector.extract_strided_slice %1 {offsets = [2, 0], sizes = [64, 1], strides = [1, 1]} : vector<80x1xf32> to vector<64x1xf32>
    %c2 = arith.constant 2 : index
    %c0_5 = arith.constant 0 : index
    %16 = vector.load %arg2[%c2, %c0_5] : memref<11x16xf32, #tpu.memory_space<vmem>>, vector<1x16xf32>
    %17 = vector.broadcast %15 : vector<64x1xf32> to vector<64x16xf32>
    %18 = vector.broadcast %16 : vector<1x16xf32> to vector<64x16xf32>
    %19 = arith.mulf %17, %18 : vector<64x16xf32>
    %20 = arith.addf %14, %19 : vector<64x16xf32>
    %21 = vector.extract_strided_slice %1 {offsets = [3, 0], sizes = [64, 1], strides = [1, 1]} : vector<80x1xf32> to vector<64x1xf32>
    %c3 = arith.constant 3 : index
    %c0_6 = arith.constant 0 : index
    %22 = vector.load %arg2[%c3, %c0_6] : memref<11x16xf32, #tpu.memory_space<vmem>>, vector<1x16xf32>
    %23 = vector.broadcast %21 : vector<64x1xf32> to vector<64x16xf32>
    %24 = vector.broadcast %22 : vector<1x16xf32> to vector<64x16xf32>
    %25 = arith.mulf %23, %24 : vector<64x16xf32>
    %26 = arith.addf %20, %25 : vector<64x16xf32>
    %27 = vector.extract_strided_slice %1 {offsets = [4, 0], sizes = [64, 1], strides = [1, 1]} : vector<80x1xf32> to vector<64x1xf32>
    %c4 = arith.constant 4 : index
    %c0_7 = arith.constant 0 : index
    %28 = vector.load %arg2[%c4, %c0_7] : memref<11x16xf32, #tpu.memory_space<vmem>>, vector<1x16xf32>
    %29 = vector.broadcast %27 : vector<64x1xf32> to vector<64x16xf32>
    %30 = vector.broadcast %28 : vector<1x16xf32> to vector<64x16xf32>
    %31 = arith.mulf %29, %30 : vector<64x16xf32>
    %32 = arith.addf %26, %31 : vector<64x16xf32>
    %33 = vector.extract_strided_slice %1 {offsets = [5, 0], sizes = [64, 1], strides = [1, 1]} : vector<80x1xf32> to vector<64x1xf32>
    %c5 = arith.constant 5 : index
    %c0_8 = arith.constant 0 : index
    %34 = vector.load %arg2[%c5, %c0_8] : memref<11x16xf32, #tpu.memory_space<vmem>>, vector<1x16xf32>
    %35 = vector.broadcast %33 : vector<64x1xf32> to vector<64x16xf32>
    %36 = vector.broadcast %34 : vector<1x16xf32> to vector<64x16xf32>
    %37 = arith.mulf %35, %36 : vector<64x16xf32>
    %38 = arith.addf %32, %37 : vector<64x16xf32>
    %39 = vector.extract_strided_slice %1 {offsets = [6, 0], sizes = [64, 1], strides = [1, 1]} : vector<80x1xf32> to vector<64x1xf32>
    %c6 = arith.constant 6 : index
    %c0_9 = arith.constant 0 : index
    %40 = vector.load %arg2[%c6, %c0_9] : memref<11x16xf32, #tpu.memory_space<vmem>>, vector<1x16xf32>
    %41 = vector.broadcast %39 : vector<64x1xf32> to vector<64x16xf32>
    %42 = vector.broadcast %40 : vector<1x16xf32> to vector<64x16xf32>
    %43 = arith.mulf %41, %42 : vector<64x16xf32>
    %44 = arith.addf %38, %43 : vector<64x16xf32>
    %45 = vector.extract_strided_slice %1 {offsets = [7, 0], sizes = [64, 1], strides = [1, 1]} : vector<80x1xf32> to vector<64x1xf32>
    %c7 = arith.constant 7 : index
    %c0_10 = arith.constant 0 : index
    %46 = vector.load %arg2[%c7, %c0_10] : memref<11x16xf32, #tpu.memory_space<vmem>>, vector<1x16xf32>
    %47 = vector.broadcast %45 : vector<64x1xf32> to vector<64x16xf32>
    %48 = vector.broadcast %46 : vector<1x16xf32> to vector<64x16xf32>
    %49 = arith.mulf %47, %48 : vector<64x16xf32>
    %50 = arith.addf %44, %49 : vector<64x16xf32>
    %51 = vector.extract_strided_slice %1 {offsets = [8, 0], sizes = [64, 1], strides = [1, 1]} : vector<80x1xf32> to vector<64x1xf32>
    %c8 = arith.constant 8 : index
    %c0_11 = arith.constant 0 : index
    %52 = vector.load %arg2[%c8, %c0_11] : memref<11x16xf32, #tpu.memory_space<vmem>>, vector<1x16xf32>
    %53 = vector.broadcast %51 : vector<64x1xf32> to vector<64x16xf32>
    %54 = vector.broadcast %52 : vector<1x16xf32> to vector<64x16xf32>
    %55 = arith.mulf %53, %54 : vector<64x16xf32>
    %56 = arith.addf %50, %55 : vector<64x16xf32>
    %57 = vector.extract_strided_slice %1 {offsets = [9, 0], sizes = [64, 1], strides = [1, 1]} : vector<80x1xf32> to vector<64x1xf32>
    %c9 = arith.constant 9 : index
    %c0_12 = arith.constant 0 : index
    %58 = vector.load %arg2[%c9, %c0_12] : memref<11x16xf32, #tpu.memory_space<vmem>>, vector<1x16xf32>
    %59 = vector.broadcast %57 : vector<64x1xf32> to vector<64x16xf32>
    %60 = vector.broadcast %58 : vector<1x16xf32> to vector<64x16xf32>
    %61 = arith.mulf %59, %60 : vector<64x16xf32>
    %62 = arith.addf %56, %61 : vector<64x16xf32>
    %63 = vector.extract_strided_slice %1 {offsets = [10, 0], sizes = [64, 1], strides = [1, 1]} : vector<80x1xf32> to vector<64x1xf32>
    %c10 = arith.constant 10 : index
    %c0_13 = arith.constant 0 : index
    %64 = vector.load %arg2[%c10, %c0_13] : memref<11x16xf32, #tpu.memory_space<vmem>>, vector<1x16xf32>
    %65 = vector.broadcast %63 : vector<64x1xf32> to vector<64x16xf32>
    %66 = vector.broadcast %64 : vector<1x16xf32> to vector<64x16xf32>
    %67 = arith.mulf %65, %66 : vector<64x16xf32>
    %68 = arith.addf %62, %67 : vector<64x16xf32>
    %c0_14 = arith.constant 0 : index
    %c0_15 = arith.constant 0 : index
    %69 = vector.load %arg5[%c0_14, %c0_15] : memref<32x64xf32, #tpu.memory_space<vmem>>, vector<32x64xf32>
    %cst_16 = arith.constant dense<0.000000e+00> : vector<32x16xf32>
    %70 = tpu.matmul %69, %68, %cst_16 {dimension_numbers = #tpu.dot_dimension_numbers<[1], [0], [0], [1], [0, 0, 1, 1], [], []>} : vector<32x64xf32>, vector<64x16xf32>, vector<32x16xf32> -> vector<32x16xf32>
    %c0_17 = arith.constant 0 : index
    %c0_18 = arith.constant 0 : index
    %71 = vector.load %arg3[%c0_17, %c0_18] : memref<1x16xf32, #tpu.memory_space<vmem>>, vector<1x16xf32>
    %72 = vector.broadcast %71 : vector<1x16xf32> to vector<32x16xf32>
    %73 = arith.mulf %70, %72 : vector<32x16xf32>
    %c0_19 = arith.constant 0 : index
    %c0_20 = arith.constant 0 : index
    %74 = vector.load %arg4[%c0_19, %c0_20] : memref<1x16xf32, #tpu.memory_space<vmem>>, vector<1x16xf32>
    %75 = vector.broadcast %74 : vector<1x16xf32> to vector<32x16xf32>
    %76 = arith.addf %73, %75 : vector<32x16xf32>
    %cst_21 = arith.constant 0.000000e+00 : f32
    %77 = vector.broadcast %cst_21 : f32 to vector<32x16xf32>
    %78 = arith.maximumf %76, %77 : vector<32x16xf32>
    %cst_22 = arith.constant 0.000000e+00 : f32
    %79 = vector.broadcast %cst_22 : f32 to vector<8x16xf32>
    %cst_23 = arith.constant 0.000000e+00 : f32
    %80 = vector.broadcast %cst_23 : f32 to vector<8x16xf32>
    %81 = tpu.concatenate %79, %78, %80 in 0 : vector<8x16xf32>, vector<32x16xf32>, vector<8x16xf32> -> vector<48x16xf32>
    %cst_24 = arith.constant 0.000000e+00 : f32
    %82 = vector.broadcast %cst_24 : f32 to vector<32x32xf32>
    %83 = vector.extract_strided_slice %81 {offsets = [3, 0], sizes = [32, 16], strides = [1, 1]} : vector<48x16xf32> to vector<32x16xf32>
    %c0_25 = arith.constant 0 : index
    %c0_26 = arith.constant 0 : index
    %84 = vector.load %arg6[%c0_25, %c0_26] : memref<176x32xf32, #tpu.memory_space<vmem>>, vector<16x32xf32>
    %cst_27 = arith.constant dense<0.000000e+00> : vector<32x32xf32>
    %85 = tpu.matmul %83, %84, %cst_27 {dimension_numbers = #tpu.dot_dimension_numbers<[1], [0], [0], [1], [0, 0, 1, 1], [], []>} : vector<32x16xf32>, vector<16x32xf32>, vector<32x32xf32> -> vector<32x32xf32>
    %86 = arith.addf %82, %85 : vector<32x32xf32>
    %87 = vector.extract_strided_slice %81 {offsets = [4, 0], sizes = [32, 16], strides = [1, 1]} : vector<48x16xf32> to vector<32x16xf32>
    %c16 = arith.constant 16 : index
    %c0_28 = arith.constant 0 : index
    %88 = vector.load %arg6[%c16, %c0_28] : memref<176x32xf32, #tpu.memory_space<vmem>>, vector<16x32xf32>
    %cst_29 = arith.constant dense<0.000000e+00> : vector<32x32xf32>
    %89 = tpu.matmul %87, %88, %cst_29 {dimension_numbers = #tpu.dot_dimension_numbers<[1], [0], [0], [1], [0, 0, 1, 1], [], []>} : vector<32x16xf32>, vector<16x32xf32>, vector<32x32xf32> -> vector<32x32xf32>
    %90 = arith.addf %86, %89 : vector<32x32xf32>
    %91 = vector.extract_strided_slice %81 {offsets = [5, 0], sizes = [32, 16], strides = [1, 1]} : vector<48x16xf32> to vector<32x16xf32>
    %c32 = arith.constant 32 : index
    %c0_30 = arith.constant 0 : index
    %92 = vector.load %arg6[%c32, %c0_30] : memref<176x32xf32, #tpu.memory_space<vmem>>, vector<16x32xf32>
    %cst_31 = arith.constant dense<0.000000e+00> : vector<32x32xf32>
    %93 = tpu.matmul %91, %92, %cst_31 {dimension_numbers = #tpu.dot_dimension_numbers<[1], [0], [0], [1], [0, 0, 1, 1], [], []>} : vector<32x16xf32>, vector<16x32xf32>, vector<32x32xf32> -> vector<32x32xf32>
    %94 = arith.addf %90, %93 : vector<32x32xf32>
    %95 = vector.extract_strided_slice %81 {offsets = [6, 0], sizes = [32, 16], strides = [1, 1]} : vector<48x16xf32> to vector<32x16xf32>
    %c48 = arith.constant 48 : index
    %c0_32 = arith.constant 0 : index
    %96 = vector.load %arg6[%c48, %c0_32] : memref<176x32xf32, #tpu.memory_space<vmem>>, vector<16x32xf32>
    %cst_33 = arith.constant dense<0.000000e+00> : vector<32x32xf32>
    %97 = tpu.matmul %95, %96, %cst_33 {dimension_numbers = #tpu.dot_dimension_numbers<[1], [0], [0], [1], [0, 0, 1, 1], [], []>} : vector<32x16xf32>, vector<16x32xf32>, vector<32x32xf32> -> vector<32x32xf32>
    %98 = arith.addf %94, %97 : vector<32x32xf32>
    %99 = vector.extract_strided_slice %81 {offsets = [7, 0], sizes = [32, 16], strides = [1, 1]} : vector<48x16xf32> to vector<32x16xf32>
    %c64 = arith.constant 64 : index
    %c0_34 = arith.constant 0 : index
    %100 = vector.load %arg6[%c64, %c0_34] : memref<176x32xf32, #tpu.memory_space<vmem>>, vector<16x32xf32>
    %cst_35 = arith.constant dense<0.000000e+00> : vector<32x32xf32>
    %101 = tpu.matmul %99, %100, %cst_35 {dimension_numbers = #tpu.dot_dimension_numbers<[1], [0], [0], [1], [0, 0, 1, 1], [], []>} : vector<32x16xf32>, vector<16x32xf32>, vector<32x32xf32> -> vector<32x32xf32>
    %102 = arith.addf %98, %101 : vector<32x32xf32>
    %103 = vector.extract_strided_slice %81 {offsets = [8, 0], sizes = [32, 16], strides = [1, 1]} : vector<48x16xf32> to vector<32x16xf32>
    %c80 = arith.constant 80 : index
    %c0_36 = arith.constant 0 : index
    %104 = vector.load %arg6[%c80, %c0_36] : memref<176x32xf32, #tpu.memory_space<vmem>>, vector<16x32xf32>
    %cst_37 = arith.constant dense<0.000000e+00> : vector<32x32xf32>
    %105 = tpu.matmul %103, %104, %cst_37 {dimension_numbers = #tpu.dot_dimension_numbers<[1], [0], [0], [1], [0, 0, 1, 1], [], []>} : vector<32x16xf32>, vector<16x32xf32>, vector<32x32xf32> -> vector<32x32xf32>
    %106 = arith.addf %102, %105 : vector<32x32xf32>
    %107 = vector.extract_strided_slice %81 {offsets = [9, 0], sizes = [32, 16], strides = [1, 1]} : vector<48x16xf32> to vector<32x16xf32>
    %c96 = arith.constant 96 : index
    %c0_38 = arith.constant 0 : index
    %108 = vector.load %arg6[%c96, %c0_38] : memref<176x32xf32, #tpu.memory_space<vmem>>, vector<16x32xf32>
    %cst_39 = arith.constant dense<0.000000e+00> : vector<32x32xf32>
    %109 = tpu.matmul %107, %108, %cst_39 {dimension_numbers = #tpu.dot_dimension_numbers<[1], [0], [0], [1], [0, 0, 1, 1], [], []>} : vector<32x16xf32>, vector<16x32xf32>, vector<32x32xf32> -> vector<32x32xf32>
    %110 = arith.addf %106, %109 : vector<32x32xf32>
    %111 = vector.extract_strided_slice %81 {offsets = [10, 0], sizes = [32, 16], strides = [1, 1]} : vector<48x16xf32> to vector<32x16xf32>
    %c112 = arith.constant 112 : index
    %c0_40 = arith.constant 0 : index
    %112 = vector.load %arg6[%c112, %c0_40] : memref<176x32xf32, #tpu.memory_space<vmem>>, vector<16x32xf32>
    %cst_41 = arith.constant dense<0.000000e+00> : vector<32x32xf32>
    %113 = tpu.matmul %111, %112, %cst_41 {dimension_numbers = #tpu.dot_dimension_numbers<[1], [0], [0], [1], [0, 0, 1, 1], [], []>} : vector<32x16xf32>, vector<16x32xf32>, vector<32x32xf32> -> vector<32x32xf32>
    %114 = arith.addf %110, %113 : vector<32x32xf32>
    %115 = vector.extract_strided_slice %81 {offsets = [11, 0], sizes = [32, 16], strides = [1, 1]} : vector<48x16xf32> to vector<32x16xf32>
    %c128 = arith.constant 128 : index
    %c0_42 = arith.constant 0 : index
    %116 = vector.load %arg6[%c128, %c0_42] : memref<176x32xf32, #tpu.memory_space<vmem>>, vector<16x32xf32>
    %cst_43 = arith.constant dense<0.000000e+00> : vector<32x32xf32>
    %117 = tpu.matmul %115, %116, %cst_43 {dimension_numbers = #tpu.dot_dimension_numbers<[1], [0], [0], [1], [0, 0, 1, 1], [], []>} : vector<32x16xf32>, vector<16x32xf32>, vector<32x32xf32> -> vector<32x32xf32>
    %118 = arith.addf %114, %117 : vector<32x32xf32>
    %119 = vector.extract_strided_slice %81 {offsets = [12, 0], sizes = [32, 16], strides = [1, 1]} : vector<48x16xf32> to vector<32x16xf32>
    %c144 = arith.constant 144 : index
    %c0_44 = arith.constant 0 : index
    %120 = vector.load %arg6[%c144, %c0_44] : memref<176x32xf32, #tpu.memory_space<vmem>>, vector<16x32xf32>
    %cst_45 = arith.constant dense<0.000000e+00> : vector<32x32xf32>
    %121 = tpu.matmul %119, %120, %cst_45 {dimension_numbers = #tpu.dot_dimension_numbers<[1], [0], [0], [1], [0, 0, 1, 1], [], []>} : vector<32x16xf32>, vector<16x32xf32>, vector<32x32xf32> -> vector<32x32xf32>
    %122 = arith.addf %118, %121 : vector<32x32xf32>
    %123 = vector.extract_strided_slice %81 {offsets = [13, 0], sizes = [32, 16], strides = [1, 1]} : vector<48x16xf32> to vector<32x16xf32>
    %c160 = arith.constant 160 : index
    %c0_46 = arith.constant 0 : index
    %124 = vector.load %arg6[%c160, %c0_46] : memref<176x32xf32, #tpu.memory_space<vmem>>, vector<16x32xf32>
    %cst_47 = arith.constant dense<0.000000e+00> : vector<32x32xf32>
    %125 = tpu.matmul %123, %124, %cst_47 {dimension_numbers = #tpu.dot_dimension_numbers<[1], [0], [0], [1], [0, 0, 1, 1], [], []>} : vector<32x16xf32>, vector<16x32xf32>, vector<32x32xf32> -> vector<32x32xf32>
    %126 = arith.addf %122, %125 : vector<32x32xf32>
    %c0_48 = arith.constant 0 : index
    %c0_49 = arith.constant 0 : index
    %127 = vector.load %arg9[%c0_48, %c0_49] : memref<16x32xf32, #tpu.memory_space<vmem>>, vector<16x32xf32>
    %cst_50 = arith.constant dense<0.000000e+00> : vector<16x32xf32>
    %128 = tpu.matmul %127, %126, %cst_50 {dimension_numbers = #tpu.dot_dimension_numbers<[1], [0], [0], [1], [0, 0, 1, 1], [], []>} : vector<16x32xf32>, vector<32x32xf32>, vector<16x32xf32> -> vector<16x32xf32>
    %c0_51 = arith.constant 0 : index
    %c0_52 = arith.constant 0 : index
    %129 = vector.load %arg7[%c0_51, %c0_52] : memref<1x32xf32, #tpu.memory_space<vmem>>, vector<1x32xf32>
    %130 = vector.broadcast %129 : vector<1x32xf32> to vector<16x32xf32>
    %131 = arith.mulf %128, %130 : vector<16x32xf32>
    %c0_53 = arith.constant 0 : index
    %c0_54 = arith.constant 0 : index
    %132 = vector.load %arg8[%c0_53, %c0_54] : memref<1x32xf32, #tpu.memory_space<vmem>>, vector<1x32xf32>
    %133 = vector.broadcast %132 : vector<1x32xf32> to vector<16x32xf32>
    %134 = arith.addf %131, %133 : vector<16x32xf32>
    %cst_55 = arith.constant 0.000000e+00 : f32
    %135 = vector.broadcast %cst_55 : f32 to vector<16x32xf32>
    %136 = arith.maximumf %134, %135 : vector<16x32xf32>
    %c0_56 = arith.constant 0 : index
    %c0_57 = arith.constant 0 : index
    %137 = vector.load %arg10[%c0_56, %c0_57] : memref<32x32xf32, #tpu.memory_space<vmem>>, vector<32x32xf32>
    %cst_58 = arith.constant dense<0.000000e+00> : vector<16x32xf32>
    %138 = tpu.matmul %136, %137, %cst_58 {dimension_numbers = #tpu.dot_dimension_numbers<[1], [0], [0], [1], [0, 0, 1, 1], [], []>} : vector<16x32xf32>, vector<32x32xf32>, vector<16x32xf32> -> vector<16x32xf32>
    %c0_59 = arith.constant 0 : index
    %c0_60 = arith.constant 0 : index
    %139 = vector.load %arg11[%c0_59, %c0_60] : memref<1x32xf32, #tpu.memory_space<vmem>>, vector<1x32xf32>
    %140 = vector.broadcast %139 : vector<1x32xf32> to vector<16x32xf32>
    %141 = arith.addf %138, %140 : vector<16x32xf32>
    %cst_61 = arith.constant 0.000000e+00 : f32
    %142 = vector.broadcast %cst_61 : f32 to vector<8x32xf32>
    %cst_62 = arith.constant 0.000000e+00 : f32
    %143 = vector.broadcast %cst_62 : f32 to vector<8x32xf32>
    %144 = tpu.concatenate %142, %141, %143 in 0 : vector<8x32xf32>, vector<16x32xf32>, vector<8x32xf32> -> vector<32x32xf32>
    %cst_63 = arith.constant 0.000000e+00 : f32
    %145 = vector.broadcast %cst_63 : f32 to vector<16x32xf32>
    %146 = vector.extract_strided_slice %144 {offsets = [3, 0], sizes = [16, 32], strides = [1, 1]} : vector<32x32xf32> to vector<16x32xf32>
    %c0_64 = arith.constant 0 : index
    %c0_65 = arith.constant 0 : index
    %147 = vector.load %arg12[%c0_64, %c0_65] : memref<11x32xf32, #tpu.memory_space<vmem>>, vector<1x32xf32>
    %148 = vector.broadcast %147 : vector<1x32xf32> to vector<16x32xf32>
    %149 = arith.mulf %146, %148 : vector<16x32xf32>
    %150 = arith.addf %145, %149 : vector<16x32xf32>
    %151 = vector.extract_strided_slice %144 {offsets = [4, 0], sizes = [16, 32], strides = [1, 1]} : vector<32x32xf32> to vector<16x32xf32>
    %c1_66 = arith.constant 1 : index
    %c0_67 = arith.constant 0 : index
    %152 = vector.load %arg12[%c1_66, %c0_67] : memref<11x32xf32, #tpu.memory_space<vmem>>, vector<1x32xf32>
    %153 = vector.broadcast %152 : vector<1x32xf32> to vector<16x32xf32>
    %154 = arith.mulf %151, %153 : vector<16x32xf32>
    %155 = arith.addf %150, %154 : vector<16x32xf32>
    %156 = vector.extract_strided_slice %144 {offsets = [5, 0], sizes = [16, 32], strides = [1, 1]} : vector<32x32xf32> to vector<16x32xf32>
    %c2_68 = arith.constant 2 : index
    %c0_69 = arith.constant 0 : index
    %157 = vector.load %arg12[%c2_68, %c0_69] : memref<11x32xf32, #tpu.memory_space<vmem>>, vector<1x32xf32>
    %158 = vector.broadcast %157 : vector<1x32xf32> to vector<16x32xf32>
    %159 = arith.mulf %156, %158 : vector<16x32xf32>
    %160 = arith.addf %155, %159 : vector<16x32xf32>
    %161 = vector.extract_strided_slice %144 {offsets = [6, 0], sizes = [16, 32], strides = [1, 1]} : vector<32x32xf32> to vector<16x32xf32>
    %c3_70 = arith.constant 3 : index
    %c0_71 = arith.constant 0 : index
    %162 = vector.load %arg12[%c3_70, %c0_71] : memref<11x32xf32, #tpu.memory_space<vmem>>, vector<1x32xf32>
    %163 = vector.broadcast %162 : vector<1x32xf32> to vector<16x32xf32>
    %164 = arith.mulf %161, %163 : vector<16x32xf32>
    %165 = arith.addf %160, %164 : vector<16x32xf32>
    %166 = vector.extract_strided_slice %144 {offsets = [7, 0], sizes = [16, 32], strides = [1, 1]} : vector<32x32xf32> to vector<16x32xf32>
    %c4_72 = arith.constant 4 : index
    %c0_73 = arith.constant 0 : index
    %167 = vector.load %arg12[%c4_72, %c0_73] : memref<11x32xf32, #tpu.memory_space<vmem>>, vector<1x32xf32>
    %168 = vector.broadcast %167 : vector<1x32xf32> to vector<16x32xf32>
    %169 = arith.mulf %166, %168 : vector<16x32xf32>
    %170 = arith.addf %165, %169 : vector<16x32xf32>
    %171 = vector.extract_strided_slice %144 {offsets = [8, 0], sizes = [16, 32], strides = [1, 1]} : vector<32x32xf32> to vector<16x32xf32>
    %c5_74 = arith.constant 5 : index
    %c0_75 = arith.constant 0 : index
    %172 = vector.load %arg12[%c5_74, %c0_75] : memref<11x32xf32, #tpu.memory_space<vmem>>, vector<1x32xf32>
    %173 = vector.broadcast %172 : vector<1x32xf32> to vector<16x32xf32>
    %174 = arith.mulf %171, %173 : vector<16x32xf32>
    %175 = arith.addf %170, %174 : vector<16x32xf32>
    %176 = vector.extract_strided_slice %144 {offsets = [9, 0], sizes = [16, 32], strides = [1, 1]} : vector<32x32xf32> to vector<16x32xf32>
    %c6_76 = arith.constant 6 : index
    %c0_77 = arith.constant 0 : index
    %177 = vector.load %arg12[%c6_76, %c0_77] : memref<11x32xf32, #tpu.memory_space<vmem>>, vector<1x32xf32>
    %178 = vector.broadcast %177 : vector<1x32xf32> to vector<16x32xf32>
    %179 = arith.mulf %176, %178 : vector<16x32xf32>
    %180 = arith.addf %175, %179 : vector<16x32xf32>
    %181 = vector.extract_strided_slice %144 {offsets = [10, 0], sizes = [16, 32], strides = [1, 1]} : vector<32x32xf32> to vector<16x32xf32>
    %c7_78 = arith.constant 7 : index
    %c0_79 = arith.constant 0 : index
    %182 = vector.load %arg12[%c7_78, %c0_79] : memref<11x32xf32, #tpu.memory_space<vmem>>, vector<1x32xf32>
    %183 = vector.broadcast %182 : vector<1x32xf32> to vector<16x32xf32>
    %184 = arith.mulf %181, %183 : vector<16x32xf32>
    %185 = arith.addf %180, %184 : vector<16x32xf32>
    %186 = vector.extract_strided_slice %144 {offsets = [11, 0], sizes = [16, 32], strides = [1, 1]} : vector<32x32xf32> to vector<16x32xf32>
    %c8_80 = arith.constant 8 : index
    %c0_81 = arith.constant 0 : index
    %187 = vector.load %arg12[%c8_80, %c0_81] : memref<11x32xf32, #tpu.memory_space<vmem>>, vector<1x32xf32>
    %188 = vector.broadcast %187 : vector<1x32xf32> to vector<16x32xf32>
    %189 = arith.mulf %186, %188 : vector<16x32xf32>
    %190 = arith.addf %185, %189 : vector<16x32xf32>
    %191 = vector.extract_strided_slice %144 {offsets = [12, 0], sizes = [16, 32], strides = [1, 1]} : vector<32x32xf32> to vector<16x32xf32>
    %c9_82 = arith.constant 9 : index
    %c0_83 = arith.constant 0 : index
    %192 = vector.load %arg12[%c9_82, %c0_83] : memref<11x32xf32, #tpu.memory_space<vmem>>, vector<1x32xf32>
    %193 = vector.broadcast %192 : vector<1x32xf32> to vector<16x32xf32>
    %194 = arith.mulf %191, %193 : vector<16x32xf32>
    %195 = arith.addf %190, %194 : vector<16x32xf32>
    %196 = vector.extract_strided_slice %144 {offsets = [13, 0], sizes = [16, 32], strides = [1, 1]} : vector<32x32xf32> to vector<16x32xf32>
    %c10_84 = arith.constant 10 : index
    %c0_85 = arith.constant 0 : index
    %197 = vector.load %arg12[%c10_84, %c0_85] : memref<11x32xf32, #tpu.memory_space<vmem>>, vector<1x32xf32>
    %198 = vector.broadcast %197 : vector<1x32xf32> to vector<16x32xf32>
    %199 = arith.mulf %196, %198 : vector<16x32xf32>
    %200 = arith.addf %195, %199 : vector<16x32xf32>
    %c0_86 = arith.constant 0 : index
    %c0_87 = arith.constant 0 : index
    %201 = vector.load %arg13[%c0_86, %c0_87] : memref<1x32xf32, #tpu.memory_space<vmem>>, vector<1x32xf32>
    %202 = vector.broadcast %201 : vector<1x32xf32> to vector<16x32xf32>
    %203 = arith.addf %200, %202 : vector<16x32xf32>
    %cst_88 = arith.constant 0.000000e+00 : f32
    %204 = vector.broadcast %cst_88 : f32 to vector<16x32xf32>
    %205 = arith.subf %204, %203 : vector<16x32xf32>
    %206 = math.exp %205 : vector<16x32xf32>
    %cst_89 = arith.constant 1.000000e+00 : f32
    %207 = vector.broadcast %cst_89 : f32 to vector<16x32xf32>
    %208 = arith.addf %207, %206 : vector<16x32xf32>
    %209 = tpu.reciprocal %208 {approx = true} : vector<16x32xf32> -> vector<16x32xf32>
    %210 = arith.mulf %141, %209 : vector<16x32xf32>
    %cst_90 = arith.constant dense<0.000000e+00> : vector<16xf32>
    %211 = vector.multi_reduction <add>, %210, %cst_90 [1] : vector<16x32xf32> to vector<16xf32>
    %212 = vector.shape_cast %211 : vector<16xf32> to vector<16x1xf32>
    %cst_91 = arith.constant 3.200000e+01 : f32
    %213 = vector.broadcast %cst_91 : f32 to vector<16x1xf32>
    %214 = arith.divf %212, %213 : vector<16x1xf32>
    %215 = vector.broadcast %214 : vector<16x1xf32> to vector<16x32xf32>
    %216 = arith.subf %210, %215 : vector<16x32xf32>
    %217 = arith.mulf %216, %216 : vector<16x32xf32>
    %cst_92 = arith.constant dense<0.000000e+00> : vector<16xf32>
    %218 = vector.multi_reduction <add>, %217, %cst_92 [1] : vector<16x32xf32> to vector<16xf32>
    %219 = vector.shape_cast %218 : vector<16xf32> to vector<16x1xf32>
    %cst_93 = arith.constant 3.200000e+01 : f32
    %220 = vector.broadcast %cst_93 : f32 to vector<16x1xf32>
    %221 = arith.divf %219, %220 : vector<16x1xf32>
    %cst_94 = arith.constant 9.99999997E-7 : f32
    %222 = vector.broadcast %cst_94 : f32 to vector<16x1xf32>
    %223 = arith.addf %221, %222 : vector<16x1xf32>
    %224 = math.rsqrt %223 : vector<16x1xf32>
    %225 = vector.broadcast %224 : vector<16x1xf32> to vector<16x32xf32>
    %226 = arith.mulf %216, %225 : vector<16x32xf32>
    %c0_95 = arith.constant 0 : index
    %c0_96 = arith.constant 0 : index
    %227 = vector.load %arg14[%c0_95, %c0_96] : memref<1x32xf32, #tpu.memory_space<vmem>>, vector<1x32xf32>
    %228 = vector.broadcast %227 : vector<1x32xf32> to vector<16x32xf32>
    %229 = arith.mulf %226, %228 : vector<16x32xf32>
    %c0_97 = arith.constant 0 : index
    %c0_98 = arith.constant 0 : index
    %230 = vector.load %arg15[%c0_97, %c0_98] : memref<1x32xf32, #tpu.memory_space<vmem>>, vector<1x32xf32>
    %231 = vector.broadcast %230 : vector<1x32xf32> to vector<16x32xf32>
    %232 = arith.addf %229, %231 : vector<16x32xf32>
    %c0_99 = arith.constant 0 : index
    %c0_100 = arith.constant 0 : index
    %c0_101 = arith.constant 0 : index
    %233 = vector.load %arg16[%c0_99, %c0_100, %c0_101] : memref<1x16x32xf32, #tpu.memory_space<vmem>>, vector<1x16x32xf32>
    %234 = vector.shape_cast %233 : vector<1x16x32xf32> to vector<16x32xf32>
    %235 = vector.shape_cast %232 : vector<16x32xf32> to vector<1x16x32xf32>
    tpu.vector_store %arg16[%c0_99, %c0_100, %c0_101], %235 {strides = array<i32>} : memref<1x16x32xf32, #tpu.memory_space<vmem>>, vector<1x16x32xf32>,
    return
  }
  func.func @transform_0(%arg0: i32) -> (i32, i32, i32) {
    %c0_i32 = arith.constant 0 : i32
    %c0_i32_0 = arith.constant 0 : i32
    %c0_i32_1 = arith.constant 0 : i32
    return %arg0, %c0_i32, %c0_i32_0 : i32, i32, i32
  }
  func.func @transform_1(%arg0: i32) -> (i32, i32) {
    %c0_i32 = arith.constant 0 : i32
    %c0_i32_0 = arith.constant 0 : i32
    %c0_i32_1 = arith.constant 0 : i32
    return %c0_i32, %c0_i32_0 : i32, i32
  }
  func.func @transform_2(%arg0: i32) -> (i32, i32) {
    %c0_i32 = arith.constant 0 : i32
    %c0_i32_0 = arith.constant 0 : i32
    %c0_i32_1 = arith.constant 0 : i32
    return %c0_i32, %c0_i32_0 : i32, i32
  }
  func.func @transform_3(%arg0: i32) -> (i32, i32) {
    %c0_i32 = arith.constant 0 : i32
    %c0_i32_0 = arith.constant 0 : i32
    %c0_i32_1 = arith.constant 0 : i32
    return %c0_i32, %c0_i32_0 : i32, i32
  }
  func.func @transform_4(%arg0: i32) -> (i32, i32) {
    %c0_i32 = arith.constant 0 : i32
    %c0_i32_0 = arith.constant 0 : i32
    %c0_i32_1 = arith.constant 0 : i32
    return %c0_i32, %c0_i32_0 : i32, i32
  }
  func.func @transform_5(%arg0: i32) -> (i32, i32) {
    %c0_i32 = arith.constant 0 : i32
    %c0_i32_0 = arith.constant 0 : i32
    %c0_i32_1 = arith.constant 0 : i32
    return %c0_i32, %c0_i32_0 : i32, i32
  }
  func.func @transform_6(%arg0: i32) -> (i32, i32) {
    %c0_i32 = arith.constant 0 : i32
    %c0_i32_0 = arith.constant 0 : i32
    %c0_i32_1 = arith.constant 0 : i32
    return %c0_i32, %c0_i32_0 : i32, i32
  }
  func.func @transform_7(%arg0: i32) -> (i32, i32) {
    %c0_i32 = arith.constant 0 : i32
    %c0_i32_0 = arith.constant 0 : i32
    %c0_i32_1 = arith.constant 0 : i32
    return %c0_i32, %c0_i32_0 : i32, i32
  }
  func.func @transform_8(%arg0: i32) -> (i32, i32) {
    %c0_i32 = arith.constant 0 : i32
    %c0_i32_0 = arith.constant 0 : i32
    %c0_i32_1 = arith.constant 0 : i32
    return %c0_i32, %c0_i32_0 : i32, i32
  }
  func.func @transform_9(%arg0: i32) -> (i32, i32) {
    %c0_i32 = arith.constant 0 : i32
    %c0_i32_0 = arith.constant 0 : i32
    %c0_i32_1 = arith.constant 0 : i32
    return %c0_i32, %c0_i32_0 : i32, i32
  }
  func.func @transform_10(%arg0: i32) -> (i32, i32) {
    %c0_i32 = arith.constant 0 : i32
    %c0_i32_0 = arith.constant 0 : i32
    %c0_i32_1 = arith.constant 0 : i32
    return %c0_i32, %c0_i32_0 : i32, i32
  }
  func.func @transform_11(%arg0: i32) -> (i32, i32) {
    %c0_i32 = arith.constant 0 : i32
    %c0_i32_0 = arith.constant 0 : i32
    %c0_i32_1 = arith.constant 0 : i32
    return %c0_i32, %c0_i32_0 : i32, i32
  }
  func.func @transform_12(%arg0: i32) -> (i32, i32) {
    %c0_i32 = arith.constant 0 : i32
    %c0_i32_0 = arith.constant 0 : i32
    %c0_i32_1 = arith.constant 0 : i32
    return %c0_i32, %c0_i32_0 : i32, i32
  }
  func.func @transform_13(%arg0: i32) -> (i32, i32) {
    %c0_i32 = arith.constant 0 : i32
    %c0_i32_0 = arith.constant 0 : i32
    %c0_i32_1 = arith.constant 0 : i32
    return %c0_i32, %c0_i32_0 : i32, i32
  }
  func.func @transform_14(%arg0: i32) -> (i32, i32) {
    %c0_i32 = arith.constant 0 : i32
    %c0_i32_0 = arith.constant 0 : i32
    %c0_i32_1 = arith.constant 0 : i32
    return %c0_i32, %c0_i32_0 : i32, i32
  }
  func.func @transform_15(%arg0: i32) -> (i32, i32, i32) {
    %c0_i32 = arith.constant 0 : i32
    %c0_i32_0 = arith.constant 0 : i32
    %c0_i32_1 = arith.constant 0 : i32
    return %arg0, %c0_i32, %c0_i32_0 : i32, i32, i32
  }
}

</mosaic_0001>

<llo_original>
// kernel: tpu_custom_call.1
$region0: #{tpu_custom_call.1}
  #allocation0 [shape = 'u32[]', space=smem, size = 0x4, offset = 0x4, fixed_abs, tag = 'smem constant byte address 0x4 - core index']
  #allocation1 [shape = 'u32[72,128]{1,0:T(1,128)}', space=vmem, size = 0x9000, scoped, tag = 'internal scratch']
  %s0 = inlined_call_operand.vmem [shape: f32[2,80,1], index: 0, kind: input, shape index: {}]
  %s1 = inlined_call_operand.vmem [shape: f32[11,16], index: 1, kind: input, shape index: {}]
  %s2 = inlined_call_operand.vmem [shape: f32[1,16], index: 2, kind: input, shape index: {}]
  %s3 = inlined_call_operand.vmem [shape: f32[1,16], index: 3, kind: input, shape index: {}]
  %s4 = inlined_call_operand.vmem [shape: f32[32,64], index: 4, kind: input, shape index: {}]
  %s5 = inlined_call_operand.vmem [shape: f32[176,32], index: 5, kind: input, shape index: {}]
  %s6 = inlined_call_operand.vmem [shape: f32[1,32], index: 6, kind: input, shape index: {}]
  %s7 = inlined_call_operand.vmem [shape: f32[1,32], index: 7, kind: input, shape index: {}]
  %s8 = inlined_call_operand.vmem [shape: f32[16,32], index: 8, kind: input, shape index: {}]
  %s9 = inlined_call_operand.vmem [shape: f32[32,32], index: 9, kind: input, shape index: {}]
  %s10 = inlined_call_operand.vmem [shape: f32[1,32], index: 10, kind: input, shape index: {}]
  %s11 = inlined_call_operand.vmem [shape: f32[11,32], index: 11, kind: input, shape index: {}]
  %s12 = inlined_call_operand.vmem [shape: f32[1,32], index: 12, kind: input, shape index: {}]
  %s13 = inlined_call_operand.vmem [shape: f32[1,32], index: 13, kind: input, shape index: {}]
  %s14 = inlined_call_operand.vmem [shape: f32[1,32], index: 14, kind: input, shape index: {}]
  %s15 = inlined_call_operand.hbm [shape: f32[2,16,32], index: 15, kind: output, shape index: {}]
  %s16 = sld [smem:[#allocation0]]
  $region93: #{tpu_custom_call.1} parent=0
    _
  %s18 = ssub.s32 1, %s16
  %s19 = scalar_select 0, %s18, %s16
  $region1: #{tpu_custom_call.1} parent=0
    #allocation2 [shape = 'u8[16384]{0}', space=vmem, size = 0x4000, scoped, tag = 'output window, operand 0']
    #allocation3 [shape = 's32[2]{0}', space=sflag, size = 0x8, scoped, tag = 'scoped memory for tpu_custom_call.1']
    %20 = vsyncpa [#allocation3], 0
    %s21 = scalar_lea.sflag [#allocation3], 1
    %22 = vsyncpa %s21, 0
    loop: start=0, step=1, limit=4
    $region2: #{tpu_custom_call.1} parent=1 // loop_pre_header
      _
    $region3: #{tpu_custom_call.1} parent=1 // loop_header
      %s24 = sphi 0, %s28
      %p25 = scmp.ge.s32.totalorder %s24, 4
      %s34 = sphi 0, %s36
      %s37 = sphi 0, %s34
      %s38 = sphi 0, %s37
      %s54 = sphi 0, %s38
      %s58 = sphi 0, %s58
      %s60 = sphi 0, %s58
      %s61 = sphi 0, %s60
      %s75 = sphi 0, %s61
      %s79 = sphi 0, %s79
      %s81 = sphi 0, %s79
      %s82 = sphi 0, %s81
      %s96 = sphi 0, %s82
      %s100 = sphi 0, %s100
      %s102 = sphi 0, %s100
      %s103 = sphi 0, %s102
      %s117 = sphi 0, %s103
      %s121 = sphi 0, %s121
      %s123 = sphi 0, %s121
      %s124 = sphi 0, %s123
      %s138 = sphi 0, %s124
      %s142 = sphi 0, %s142
      %s144 = sphi 0, %s142
      %s145 = sphi 0, %s144
      %s159 = sphi 0, %s145
      %s163 = sphi 0, %s163
      %s165 = sphi 0, %s163
      %s166 = sphi 0, %s165
      %s180 = sphi 0, %s166
      %s184 = sphi 0, %s184
      %s186 = sphi 0, %s184
      %s187 = sphi 0, %s186
      %s201 = sphi 0, %s187
      %s205 = sphi 0, %s205
      %s207 = sphi 0, %s205
      %s208 = sphi 0, %s207
      %s222 = sphi 0, %s208
      %s226 = sphi 0, %s226
      %s228 = sphi 0, %s226
      %s229 = sphi 0, %s228
      %s243 = sphi 0, %s229
      %s247 = sphi 0, %s247
      %s249 = sphi 0, %s247
      %s250 = sphi 0, %s249
      %s264 = sphi 0, %s250
      %s268 = sphi 0, %s268
      %s270 = sphi 0, %s268
      %s271 = sphi 0, %s270
      %s285 = sphi 0, %s271
      %s289 = sphi 0, %s289
      %s291 = sphi 0, %s289
      %s292 = sphi 0, %s291
      %s306 = sphi 0, %s292
      %s310 = sphi 0, %s310
      %s312 = sphi 0, %s310
      %s313 = sphi 0, %s312
      %s327 = sphi 0, %s313
      %s331 = sphi 0, %s331
      %s333 = sphi 0, %s331
      %s334 = sphi 0, %s333
      %s348 = sphi 0, %s334
      %s354 = sphi 0, %s356
      %s357 = sphi 0, %s354
      %s358 = sphi 0, %s357
      %s374 = sphi 0, %s358
    $region4: #{tpu_custom_call.1} parent=1 // loop_header_branch
      %27 = sbr.rel (%p25) target = $region8
    $region5: #{tpu_custom_call.1} parent=1 // loop_body
      %s29 = ssub.s32 %s24, 1
      %s30 = ssub.s32 %s24, 2
      %s31 = sadd.s32 %s24, 1
      %s32 = ssub.s32 %s24, %s31
      %p33 = scmp.eq.s32.totalorder %s32, 0
      %s35 = sadd.s32 %s34, 1
      %s36 = scalar_select %p33, %s34, %s35
      %p39 = pneg %p33
      %p40 = scmp.eq.s32.totalorder %s24, 1
      %p41 = por %p39, %p40
      %p42 = scmp.ne.s32.totalorder %s34, %s37
      %p43 = scmp.eq.s32.totalorder %s24, 0
      %p44 = por %p42, %p43
      %p45 = scmp.ne.s32.totalorder %s34, %s37
      %p46 = scmp.eq.s32.totalorder %s29, 1
      %p47 = por %p45, %p46
      %p48 = scmp.ne.s32.totalorder %s37, %s38
      %p49 = scmp.eq.s32.totalorder %s29, 0
      %p50 = por %p48, %p49
      %p51 = scmp.ne.s32.totalorder %s37, %s38
      %p52 = scmp.eq.s32.totalorder %s30, 1
      %p53 = por %p51, %p52
      %p55 = scmp.ne.s32.totalorder %s38, %s54
      %p56 = scmp.eq.s32.totalorder %s30, 0
      %p57 = por %p55, %p56
      %s59 = sadd.s32 %s58, 1
      %p62 = scmp.eq.s32.totalorder %s24, 1
      %p63 = scmp.ne.s32.totalorder %s58, %s60
      %p64 = scmp.eq.s32.totalorder %s24, 0
      %p65 = por %p63, %p64
      %p66 = scmp.ne.s32.totalorder %s58, %s60
      %p67 = scmp.eq.s32.totalorder %s29, 1
      %p68 = por %p66, %p67
      %p69 = scmp.ne.s32.totalorder %s60, %s61
      %p70 = scmp.eq.s32.totalorder %s29, 0
      %p71 = por %p69, %p70
      %p72 = scmp.ne.s32.totalorder %s60, %s61
      %p73 = scmp.eq.s32.totalorder %s30, 1
      %p74 = por %p72, %p73
      %p76 = scmp.ne.s32.totalorder %s61, %s75
      %p77 = scmp.eq.s32.totalorder %s30, 0
      %p78 = por %p76, %p77
      %s80 = sadd.s32 %s79, 1
      %p83 = scmp.eq.s32.totalorder %s24, 1
      %p84 = scmp.ne.s32.totalorder %s79, %s81
      %p85 = scmp.eq.s32.totalorder %s24, 0
      %p86 = por %p84, %p85
      %p87 = scmp.ne.s32.totalorder %s79, %s81
      %p88 = scmp.eq.s32.totalorder %s29, 1
      %p89 = por %p87, %p88
      %p90 = scmp.ne.s32.totalorder %s81, %s82
      %p91 = scmp.eq.s32.totalorder %s29, 0
      %p92 = por %p90, %p91
      %p93 = scmp.ne.s32.totalorder %s81, %s82
      %p94 = scmp.eq.s32.totalorder %s30, 1
      %p95 = por %p93, %p94
      %p97 = scmp.ne.s32.totalorder %s82, %s96
      %p98 = scmp.eq.s32.totalorder %s30, 0
      %p99 = por %p97, %p98
      %s101 = sadd.s32 %s100, 1
      %p104 = scmp.eq.s32.totalorder %s24, 1
      %p105 = scmp.ne.s32.totalorder %s100, %s102
      %p106 = scmp.eq.s32.totalorder %s24, 0
      %p107 = por %p105, %p106
      %p108 = scmp.ne.s32.totalorder %s100, %s102
      %p109 = scmp.eq.s32.totalorder %s29, 1
      %p110 = por %p108, %p109
      %p111 = scmp.ne.s32.totalorder %s102, %s103
      %p112 = scmp.eq.s32.totalorder %s29, 0
      %p113 = por %p111, %p112
      %p114 = scmp.ne.s32.totalorder %s102, %s103
      %p115 = scmp.eq.s32.totalorder %s30, 1
      %p116 = por %p114, %p115
      %p118 = scmp.ne.s32.totalorder %s103, %s117
      %p119 = scmp.eq.s32.totalorder %s30, 0
      %p120 = por %p118, %p119
      %s122 = sadd.s32 %s121, 1
      %p125 = scmp.eq.s32.totalorder %s24, 1
      %p126 = scmp.ne.s32.totalorder %s121, %s123
      %p127 = scmp.eq.s32.totalorder %s24, 0
      %p128 = por %p126, %p127
      %p129 = scmp.ne.s32.totalorder %s121, %s123
      %p130 = scmp.eq.s32.totalorder %s29, 1
      %p131 = por %p129, %p130
      %p132 = scmp.ne.s32.totalorder %s123, %s124
      %p133 = scmp.eq.s32.totalorder %s29, 0
      %p134 = por %p132, %p133
      %p135 = scmp.ne.s32.totalorder %s123, %s124
      %p136 = scmp.eq.s32.totalorder %s30, 1
      %p137 = por %p135, %p136
      %p139 = scmp.ne.s32.totalorder %s124, %s138
      %p140 = scmp.eq.s32.totalorder %s30, 0
      %p141 = por %p139, %p140
      %s143 = sadd.s32 %s142, 1
      %p146 = scmp.eq.s32.totalorder %s24, 1
      %p147 = scmp.ne.s32.totalorder %s142, %s144
      %p148 = scmp.eq.s32.totalorder %s24, 0
      %p149 = por %p147, %p148
      %p150 = scmp.ne.s32.totalorder %s142, %s144
      %p151 = scmp.eq.s32.totalorder %s29, 1
      %p152 = por %p150, %p151
      %p153 = scmp.ne.s32.totalorder %s144, %s145
      %p154 = scmp.eq.s32.totalorder %s29, 0
      %p155 = por %p153, %p154
      %p156 = scmp.ne.s32.totalorder %s144, %s145
      %p157 = scmp.eq.s32.totalorder %s30, 1
      %p158 = por %p156, %p157
      %p160 = scmp.ne.s32.totalorder %s145, %s159
      %p161 = scmp.eq.s32.totalorder %s30, 0
      %p162 = por %p160, %p161
      %s164 = sadd.s32 %s163, 1
      %p167 = scmp.eq.s32.totalorder %s24, 1
      %p168 = scmp.ne.s32.totalorder %s163, %s165
      %p169 = scmp.eq.s32.totalorder %s24, 0
      %p170 = por %p168, %p169
      %p171 = scmp.ne.s32.totalorder %s163, %s165
      %p172 = scmp.eq.s32.totalorder %s29, 1
      %p173 = por %p171, %p172
      %p174 = scmp.ne.s32.totalorder %s165, %s166
      %p175 = scmp.eq.s32.totalorder %s29, 0
      %p176 = por %p174, %p175
      %p177 = scmp.ne.s32.totalorder %s165, %s166
      %p178 = scmp.eq.s32.totalorder %s30, 1
      %p179 = por %p177, %p178
      %p181 = scmp.ne.s32.totalorder %s166, %s180
      %p182 = scmp.eq.s32.totalorder %s30, 0
      %p183 = por %p181, %p182
      %s185 = sadd.s32 %s184, 1
      %p188 = scmp.eq.s32.totalorder %s24, 1
      %p189 = scmp.ne.s32.totalorder %s184, %s186
      %p190 = scmp.eq.s32.totalorder %s24, 0
      %p191 = por %p189, %p190
      %p192 = scmp.ne.s32.totalorder %s184, %s186
      %p193 = scmp.eq.s32.totalorder %s29, 1
      %p194 = por %p192, %p193
      %p195 = scmp.ne.s32.totalorder %s186, %s187
      %p196 = scmp.eq.s32.totalorder %s29, 0
      %p197 = por %p195, %p196
      %p198 = scmp.ne.s32.totalorder %s186, %s187
      %p199 = scmp.eq.s32.totalorder %s30, 1
      %p200 = por %p198, %p199
      %p202 = scmp.ne.s32.totalorder %s187, %s201
      %p203 = scmp.eq.s32.totalorder %s30, 0
      %p204 = por %p202, %p203
      %s206 = sadd.s32 %s205, 1
      %p209 = scmp.eq.s32.totalorder %s24, 1
      %p210 = scmp.ne.s32.totalorder %s205, %s207
      %p211 = scmp.eq.s32.totalorder %s24, 0
      %p212 = por %p210, %p211
      %p213 = scmp.ne.s32.totalorder %s205, %s207
      %p214 = scmp.eq.s32.totalorder %s29, 1
      %p215 = por %p213, %p214
      %p216 = scmp.ne.s32.totalorder %s207, %s208
      %p217 = scmp.eq.s32.totalorder %s29, 0
      %p218 = por %p216, %p217
      %p219 = scmp.ne.s32.totalorder %s207, %s208
      %p220 = scmp.eq.s32.totalorder %s30, 1
      %p221 = por %p219, %p220
      %p223 = scmp.ne.s32.totalorder %s208, %s222
      %p224 = scmp.eq.s32.totalorder %s30, 0
      %p225 = por %p223, %p224
      %s227 = sadd.s32 %s226, 1
      %p230 = scmp.eq.s32.totalorder %s24, 1
      %p231 = scmp.ne.s32.totalorder %s226, %s228
      %p232 = scmp.eq.s32.totalorder %s24, 0
      %p233 = por %p231, %p232
      %p234 = scmp.ne.s32.totalorder %s226, %s228
      %p235 = scmp.eq.s32.totalorder %s29, 1
      %p236 = por %p234, %p235
      %p237 = scmp.ne.s32.totalorder %s228, %s229
      %p238 = scmp.eq.s32.totalorder %s29, 0
      %p239 = por %p237, %p238
      %p240 = scmp.ne.s32.totalorder %s228, %s229
      %p241 = scmp.eq.s32.totalorder %s30, 1
      %p242 = por %p240, %p241
      %p244 = scmp.ne.s32.totalorder %s229, %s243
      %p245 = scmp.eq.s32.totalorder %s30, 0
      %p246 = por %p244, %p245
      %s248 = sadd.s32 %s247, 1
      %p251 = scmp.eq.s32.totalorder %s24, 1
      %p252 = scmp.ne.s32.totalorder %s247, %s249
      %p253 = scmp.eq.s32.totalorder %s24, 0
      %p254 = por %p252, %p253
      %p255 = scmp.ne.s32.totalorder %s247, %s249
      %p256 = scmp.eq.s32.totalorder %s29, 1
      %p257 = por %p255, %p256
      %p258 = scmp.ne.s32.totalorder %s249, %s250
      %p259 = scmp.eq.s32.totalorder %s29, 0
      %p260 = por %p258, %p259
      %p261 = scmp.ne.s32.totalorder %s249, %s250
      %p262 = scmp.eq.s32.totalorder %s30, 1
      %p263 = por %p261, %p262
      %p265 = scmp.ne.s32.totalorder %s250, %s264
      %p266 = scmp.eq.s32.totalorder %s30, 0
      %p267 = por %p265, %p266
      %s269 = sadd.s32 %s268, 1
      %p272 = scmp.eq.s32.totalorder %s24, 1
      %p273 = scmp.ne.s32.totalorder %s268, %s270
      %p274 = scmp.eq.s32.totalorder %s24, 0
      %p275 = por %p273, %p274
      %p276 = scmp.ne.s32.totalorder %s268, %s270
      %p277 = scmp.eq.s32.totalorder %s29, 1
      %p278 = por %p276, %p277
      %p279 = scmp.ne.s32.totalorder %s270, %s271
      %p280 = scmp.eq.s32.totalorder %s29, 0
      %p281 = por %p279, %p280
      %p282 = scmp.ne.s32.totalorder %s270, %s271
      %p283 = scmp.eq.s32.totalorder %s30, 1
      %p284 = por %p282, %p283
      %p286 = scmp.ne.s32.totalorder %s271, %s285
      %p287 = scmp.eq.s32.totalorder %s30, 0
      %p288 = por %p286, %p287
      %s290 = sadd.s32 %s289, 1
      %p293 = scmp.eq.s32.totalorder %s24, 1
      %p294 = scmp.ne.s32.totalorder %s289, %s291
      %p295 = scmp.eq.s32.totalorder %s24, 0
      %p296 = por %p294, %p295
      %p297 = scmp.ne.s32.totalorder %s289, %s291
      %p298 = scmp.eq.s32.totalorder %s29, 1
      %p299 = por %p297, %p298
      %p300 = scmp.ne.s32.totalorder %s291, %s292
      %p301 = scmp.eq.s32.totalorder %s29, 0
      %p302 = por %p300, %p301
      %p303 = scmp.ne.s32.totalorder %s291, %s292
      %p304 = scmp.eq.s32.totalorder %s30, 1
      %p305 = por %p303, %p304
      %p307 = scmp.ne.s32.totalorder %s292, %s306
      %p308 = scmp.eq.s32.totalorder %s30, 0
      %p309 = por %p307, %p308
      %s311 = sadd.s32 %s310, 1
      %p314 = scmp.eq.s32.totalorder %s24, 1
      %p315 = scmp.ne.s32.totalorder %s310, %s312
      %p316 = scmp.eq.s32.totalorder %s24, 0
      %p317 = por %p315, %p316
      %p318 = scmp.ne.s32.totalorder %s310, %s312
      %p319 = scmp.eq.s32.totalorder %s29, 1
      %p320 = por %p318, %p319
      %p321 = scmp.ne.s32.totalorder %s312, %s313
      %p322 = scmp.eq.s32.totalorder %s29, 0
      %p323 = por %p321, %p322
      %p324 = scmp.ne.s32.totalorder %s312, %s313
      %p325 = scmp.eq.s32.totalorder %s30, 1
      %p326 = por %p324, %p325
      %p328 = scmp.ne.s32.totalorder %s313, %s327
      %p329 = scmp.eq.s32.totalorder %s30, 0
      %p330 = por %p328, %p329
      %s332 = sadd.s32 %s331, 1
      %p335 = scmp.eq.s32.totalorder %s24, 1
      %p336 = scmp.ne.s32.totalorder %s331, %s333
      %p337 = scmp.eq.s32.totalorder %s24, 0
      %p338 = por %p336, %p337
      %p339 = scmp.ne.s32.totalorder %s331, %s333
      %p340 = scmp.eq.s32.totalorder %s29, 1
      %p341 = por %p339, %p340
      %p342 = scmp.ne.s32.totalorder %s333, %s334
      %p343 = scmp.eq.s32.totalorder %s29, 0
      %p344 = por %p342, %p343
      %p345 = scmp.ne.s32.totalorder %s333, %s334
      %p346 = scmp.eq.s32.totalorder %s30, 1
      %p347 = por %p345, %p346
      %p349 = scmp.ne.s32.totalorder %s334, %s348
      %p350 = scmp.eq.s32.totalorder %s30, 0
      %p351 = por %p349, %p350
      %s352 = ssub.s32 %s24, %s31
      %p353 = scmp.eq.s32.totalorder %s352, 0
      %s355 = sadd.s32 %s354, 1
      %s356 = scalar_select %p353, %s354, %s355
      %p359 = pneg %p353
      %p360 = scmp.eq.s32.totalorder %s24, 1
      %p361 = por %p359, %p360
      %p362 = scmp.ne.s32.totalorder %s354, %s357
      %p363 = scmp.eq.s32.totalorder %s24, 0
      %p364 = por %p362, %p363
      %p365 = scmp.ne.s32.totalorder %s354, %s357
      %p366 = scmp.eq.s32.totalorder %s29, 1
      %p367 = por %p365, %p366
      %p368 = scmp.ne.s32.totalorder %s357, %s358
      %p369 = scmp.eq.s32.totalorder %s29, 0
      %p370 = por %p368, %p369
      %p371 = scmp.ne.s32.totalorder %s357, %s358
      %p372 = scmp.eq.s32.totalorder %s30, 1
      %p373 = por %p371, %p372
      %p375 = scmp.ne.s32.totalorder %s358, %s374
      %p376 = scmp.eq.s32.totalorder %s30, 0
      %p377 = por %p375, %p376
      %p378 = scmp.le.s32.totalorder 1, %s24
      %p379 = scmp.lt.s32.totalorder %s24, 3
      %p380 = pnand %p378, %p379
      %p381 = pneg %p380
      // Predicated region
      $region9: #{tpu_custom_call.1} parent=5 // pred_check
        _
      $region10: #{tpu_custom_call.1} parent=5 // pred_check_branch
        %383 = sbr.rel (%p380) target = $region12
      $region11: #{tpu_custom_call.1} parent=5 // pred_region
        %s384 = ssub.s32 %s24, 1
        // Predicated region
        $region13: #{tpu_custom_call.1} parent=11 // pred_check
          %p385 = pneg %p71
        $region14: #{tpu_custom_call.1} parent=11 // pred_check_branch
          %387 = sbr.rel (%p385) target = $region16
        $region15: #{tpu_custom_call.1} parent=11 // pred_region
          _
        $region16: #{tpu_custom_call.1} parent=11 // pred_fallthru
          _
        // Predicated region
        $region17: #{tpu_custom_call.1} parent=11 // pred_check
          %p388 = pneg %p92
        $region18: #{tpu_custom_call.1} parent=11 // pred_check_branch
          %390 = sbr.rel (%p388) target = $region20
        $region19: #{tpu_custom_call.1} parent=11 // pred_region
          _
        $region20: #{tpu_custom_call.1} parent=11 // pred_fallthru
          _
        // Predicated region
        $region21: #{tpu_custom_call.1} parent=11 // pred_check
          %p391 = pneg %p113
        $region22: #{tpu_custom_call.1} parent=11 // pred_check_branch
          %393 = sbr.rel (%p391) target = $region24
        $region23: #{tpu_custom_call.1} parent=11 // pred_region
          _
        $region24: #{tpu_custom_call.1} parent=11 // pred_fallthru
          _
        // Predicated region
        $region25: #{tpu_custom_call.1} parent=11 // pred_check
          %p394 = pneg %p134
        $region26: #{tpu_custom_call.1} parent=11 // pred_check_branch
          %396 = sbr.rel (%p394) target = $region28
        $region27: #{tpu_custom_call.1} parent=11 // pred_region
          _
        $region28: #{tpu_custom_call.1} parent=11 // pred_fallthru
          _
        // Predicated region
        $region29: #{tpu_custom_call.1} parent=11 // pred_check
          %p397 = pneg %p155
        $region30: #{tpu_custom_call.1} parent=11 // pred_check_branch
          %399 = sbr.rel (%p397) target = $region32
        $region31: #{tpu_custom_call.1} parent=11 // pred_region
          _
        $region32: #{tpu_custom_call.1} parent=11 // pred_fallthru
          _
        // Predicated region
        $region33: #{tpu_custom_call.1} parent=11 // pred_check
          %p400 = pneg %p176
        $region34: #{tpu_custom_call.1} parent=11 // pred_check_branch
          %402 = sbr.rel (%p400) target = $region36
        $region35: #{tpu_custom_call.1} parent=11 // pred_region
          _
        $region36: #{tpu_custom_call.1} parent=11 // pred_fallthru
          _
        // Predicated region
        $region37: #{tpu_custom_call.1} parent=11 // pred_check
          %p403 = pneg %p197
        $region38: #{tpu_custom_call.1} parent=11 // pred_check_branch
          %405 = sbr.rel (%p403) target = $region40
        $region39: #{tpu_custom_call.1} parent=11 // pred_region
          _
        $region40: #{tpu_custom_call.1} parent=11 // pred_fallthru
          _
        // Predicated region
        $region41: #{tpu_custom_call.1} parent=11 // pred_check
          %p406 = pneg %p218
        $region42: #{tpu_custom_call.1} parent=11 // pred_check_branch
          %408 = sbr.rel (%p406) target = $region44
        $region43: #{tpu_custom_call.1} parent=11 // pred_region
          _
        $region44: #{tpu_custom_call.1} parent=11 // pred_fallthru
          _
        // Predicated region
        $region45: #{tpu_custom_call.1} parent=11 // pred_check
          %p409 = pneg %p239
        $region46: #{tpu_custom_call.1} parent=11 // pred_check_branch
          %411 = sbr.rel (%p409) target = $region48
        $region47: #{tpu_custom_call.1} parent=11 // pred_region
          _
        $region48: #{tpu_custom_call.1} parent=11 // pred_fallthru
          _
        // Predicated region
        $region49: #{tpu_custom_call.1} parent=11 // pred_check
          %p412 = pneg %p260
        $region50: #{tpu_custom_call.1} parent=11 // pred_check_branch
          %414 = sbr.rel (%p412) target = $region52
        $region51: #{tpu_custom_call.1} parent=11 // pred_region
          _
        $region52: #{tpu_custom_call.1} parent=11 // pred_fallthru
          _
        // Predicated region
        $region53: #{tpu_custom_call.1} parent=11 // pred_check
          %p415 = pneg %p281
        $region54: #{tpu_custom_call.1} parent=11 // pred_check_branch
          %417 = sbr.rel (%p415) target = $region56
        $region55: #{tpu_custom_call.1} parent=11 // pred_region
          _
        $region56: #{tpu_custom_call.1} parent=11 // pred_fallthru
          _
        // Predicated region
        $region57: #{tpu_custom_call.1} parent=11 // pred_check
          %p418 = pneg %p302
        $region58: #{tpu_custom_call.1} parent=11 // pred_check_branch
          %420 = sbr.rel (%p418) target = $region60
        $region59: #{tpu_custom_call.1} parent=11 // pred_region
          _
        $region60: #{tpu_custom_call.1} parent=11 // pred_fallthru
          _
        // Predicated region
        $region61: #{tpu_custom_call.1} parent=11 // pred_check
          %p421 = pneg %p323
        $region62: #{tpu_custom_call.1} parent=11 // pred_check_branch
          %423 = sbr.rel (%p421) target = $region64
        $region63: #{tpu_custom_call.1} parent=11 // pred_region
          _
        $region64: #{tpu_custom_call.1} parent=11 // pred_fallthru
          _
        // Predicated region
        $region65: #{tpu_custom_call.1} parent=11 // pred_check
          %p424 = pneg %p344
        $region66: #{tpu_custom_call.1} parent=11 // pred_check_branch
          %426 = sbr.rel (%p424) target = $region68
        $region67: #{tpu_custom_call.1} parent=11 // pred_region
          _
        $region68: #{tpu_custom_call.1} parent=11 // pred_fallthru
          _
      $region12: #{tpu_custom_call.1} parent=5 // pred_fallthru
        _
      %p427 = scmp.lt.s32.totalorder %s24, 2
      // Predicated region
      $region69: #{tpu_custom_call.1} parent=5 // pred_check
        %p428 = pneg %p427
      $region70: #{tpu_custom_call.1} parent=5 // pred_check_branch
        %430 = sbr.rel (%p428) target = $region72
      $region71: #{tpu_custom_call.1} parent=5 // pred_region
        // Predicated region
        $region73: #{tpu_custom_call.1} parent=71 // pred_check
          %p431 = pneg %p44
        $region74: #{tpu_custom_call.1} parent=71 // pred_check_branch
          %433 = sbr.rel (%p431) target = $region76
        $region75: #{tpu_custom_call.1} parent=71 // pred_region
          %p434 = scmp.lt.s32.totalorder %s24, 1
          %s435 = scalar_select %p434, %s24, 1
          %s436 = smul.addr %s435, 10
          %s437 = smul.addr %s436, 8
          %s438 = scalar_lea.vmem %s0, %s437
        $region76: #{tpu_custom_call.1} parent=71 // pred_fallthru
          _
      $region72: #{tpu_custom_call.1} parent=5 // pred_fallthru
        _
      %p439 = scmp.le.s32.totalorder 1, %s24
      %p440 = scmp.lt.s32.totalorder %s24, 3
      %p441 = pnand %p439, %p440
      %p442 = pneg %p441
      // Predicated region
      $region77: #{tpu_custom_call.1} parent=5 // pred_check
        _
      $region78: #{tpu_custom_call.1} parent=5 // pred_check_branch
        %444 = sbr.rel (%p441) target = $region80
      $region79: #{tpu_custom_call.1} parent=5 // pred_region
        %s445 = ssub.s32 %s24, 1
        %p446 = scmp.lt.s32.totalorder %s29, 1
        %s447 = scalar_select %p446, %s29, 1
        %s448 = smul.addr %s447, 10
        %s449 = smul.addr %s448, 8
        %s450 = scalar_lea.vmem %s0, %s449
        %p451 = pneg %p50
        %p452 = pneg %p47
        %p453 = pneg %p71
        %p454 = pneg %p68
        %p455 = pneg %p92
        %p456 = pneg %p89
        %p457 = pneg %p113
        %p458 = pneg %p110
        %p459 = pneg %p134
        %p460 = pneg %p131
        %p461 = pneg %p155
        %p462 = pneg %p152
        %p463 = pneg %p176
        %p464 = pneg %p173
        %p465 = pneg %p197
        %p466 = pneg %p194
        %p467 = pneg %p218
        %p468 = pneg %p215
        %p469 = pneg %p239
        %p470 = pneg %p236
        %p471 = pneg %p260
        %p472 = pneg %p257
        %p473 = pneg %p281
        %p474 = pneg %p278
        %p475 = pneg %p302
        %p476 = pneg %p299
        %p477 = pneg %p323
        %p478 = pneg %p320
        %p479 = pneg %p344
        %p480 = pneg %p341
        %p481 = pneg %p370
        %p482 = pneg %p367
        %s483 = sand.u32 %s357, 1
        %s484 = scalar_lea.sflag [#allocation3], %s483
        %s485 = sand.u32 %s357, 1
        %s486 = smul.addr %s485, 16
        %s487 = scalar_lea.vmem [#allocation2], %s486
        %p488 = scmp.lt.s32.totalorder %s29, 1
        %s489 = scalar_select %p488, %s29, 1
        %s490 = smul.addr %s489, 10
        %s491 = smul.addr %s490, 8
        %s492 = scalar_lea.vmem %s0, %s491
        %v493 = vld [vmem:[%s492] sm:$0xff]
        %v494 = vld [vmem:[%s492 + $0x8] sm:$0xff]
        %v495 = vld [vmem:[%s492 + $0x10] sm:$0xff]
        %v496 = vld [vmem:[%s492 + $0x18] sm:$0xff]
        %v497 = vld [vmem:[%s492 + $0x20] sm:$0xff]
        %v498 = vld [vmem:[%s492 + $0x28] sm:$0xff]
        %v499 = vld [vmem:[%s492 + $0x30] sm:$0xff]
        %v500 = vld [vmem:[%s492 + $0x38] sm:$0xff]
        %v501 = vld [vmem:[%s492 + $0x40] sm:$0xff]
        %v502 = vld [vmem:[%s492 + $0x48] sm:$0xff]
        %v503 = vld [vmem:[%s1] sm:$0x1]
        %505 = vset.pattern.permute.xlu0 0
        %506 = vperm.xlu0 %505, %v493
        %v507 = vpop.permute.xlu0 %506
        %510 = vset.pattern.permute.xlu0 0
        %511 = vperm.xlu0 %510, %v494
        %v512 = vpop.permute.xlu0 %511
        %515 = vset.pattern.permute.xlu0 0
        %516 = vperm.xlu0 %515, %v495
        %v517 = vpop.permute.xlu0 %516
        %520 = vset.pattern.permute.xlu0 0
        %521 = vperm.xlu0 %520, %v496
        %v522 = vpop.permute.xlu0 %521
        %525 = vset.pattern.permute.xlu0 0
        %526 = vperm.xlu0 %525, %v497
        %v527 = vpop.permute.xlu0 %526
        %530 = vset.pattern.permute.xlu0 0
        %531 = vperm.xlu0 %530, %v498
        %v532 = vpop.permute.xlu0 %531
        %535 = vset.pattern.permute.xlu0 0
        %536 = vperm.xlu0 %535, %v499
        %v537 = vpop.permute.xlu0 %536
        %540 = vset.pattern.permute.xlu0 0
        %541 = vperm.xlu0 %540, %v500
        %v542 = vpop.permute.xlu0 %541
        %v544 = vperm.slane %v503, 0
        %v545 = vmul.f32 %v507, %v544
        %v546 = vmul.f32 %v512, %v544
        %v547 = vmul.f32 %v517, %v544
        %v548 = vmul.f32 %v522, %v544
        %v549 = vmul.f32 %v527, %v544
        %v550 = vmul.f32 %v532, %v544
        %v551 = vmul.f32 %v537, %v544
        %v552 = vmul.f32 %v542, %v544
        %v553 = vadd.f32 %v545, 0.0
        %v554 = vadd.f32 %v546, 0.0
        %v555 = vadd.f32 %v547, 0.0
        %v556 = vadd.f32 %v548, 0.0
        %v557 = vadd.f32 %v549, 0.0
        %v558 = vadd.f32 %v550, 0.0
        %v559 = vadd.f32 %v551, 0.0
        %v560 = vadd.f32 %v552, 0.0
        %v561 = vld [vmem:[%s1 + $0x1] sm:$0x1]
        %563 = vset.pattern.permute.xlu0 0
        %564 = vperm.xlu0 %563, %v501
        %v565 = vpop.permute.xlu0 %564
        %v567 = vperm.slane %v561, 0
        %v568 = vmul.f32 %v507, %v567
        %v569 = vmul.f32 %v512, %v567
        %v570 = vmul.f32 %v517, %v567
        %v571 = vmul.f32 %v522, %v567
        %v572 = vmul.f32 %v527, %v567
        %v573 = vmul.f32 %v532, %v567
        %v574 = vmul.f32 %v537, %v567
        %v575 = vmul.f32 %v542, %v567
        %v576 = vmul.f32 %v565, %v567
        %vm586 = vcmask 1046528
        %v587 = vrot.slane %v568, 1
        %v588 = vrot.slane %v569, 1
        %v589 = vsel %vm586, %v587, %v588
        %v590 = vrot.slane %v570, 1
        %v591 = vsel %vm586, %v588, %v590
        %v592 = vrot.slane %v571, 1
        %v593 = vsel %vm586, %v590, %v592
        %v594 = vrot.slane %v572, 1
        %v595 = vsel %vm586, %v592, %v594
        %v596 = vrot.slane %v573, 1
        %v597 = vsel %vm586, %v594, %v596
        %v598 = vrot.slane %v574, 1
        %v599 = vsel %vm586, %v596, %v598
        %v600 = vrot.slane %v575, 1
        %v601 = vsel %vm586, %v598, %v600
        %v602 = vrot.slane %v576, 1
        %v603 = vsel %vm586, %v600, %v602
        %v612 = vadd.f32 %v553, %v589
        %v613 = vadd.f32 %v554, %v591
        %v614 = vadd.f32 %v555, %v593
        %v615 = vadd.f32 %v556, %v595
        %v616 = vadd.f32 %v557, %v597
        %v617 = vadd.f32 %v558, %v599
        %v618 = vadd.f32 %v559, %v601
        %v619 = vadd.f32 %v560, %v603
        %v620 = vld [vmem:[%s1 + $0x2] sm:$0x1]
        %v621 = vperm.slane %v620, 0
        %v622 = vmul.f32 %v507, %v621
        %v623 = vmul.f32 %v512, %v621
        %v624 = vmul.f32 %v517, %v621
        %v625 = vmul.f32 %v522, %v621
        %v626 = vmul.f32 %v527, %v621
        %v627 = vmul.f32 %v532, %v621
        %v628 = vmul.f32 %v537, %v621
        %v629 = vmul.f32 %v542, %v621
        %v630 = vmul.f32 %v565, %v621
        %vm640 = vcmask 1045504
        %v641 = vrot.slane %v622, 2
        %v642 = vrot.slane %v623, 2
        %v643 = vsel %vm640, %v641, %v642
        %v644 = vrot.slane %v624, 2
        %v645 = vsel %vm640, %v642, %v644
        %v646 = vrot.slane %v625, 2
        %v647 = vsel %vm640, %v644, %v646
        %v648 = vrot.slane %v626, 2
        %v649 = vsel %vm640, %v646, %v648
        %v650 = vrot.slane %v627, 2
        %v651 = vsel %vm640, %v648, %v650
        %v652 = vrot.slane %v628, 2
        %v653 = vsel %vm640, %v650, %v652
        %v654 = vrot.slane %v629, 2
        %v655 = vsel %vm640, %v652, %v654
        %v656 = vrot.slane %v630, 2
        %v657 = vsel %vm640, %v654, %v656
        %v666 = vadd.f32 %v612, %v643
        %v667 = vadd.f32 %v613, %v645
        %v668 = vadd.f32 %v614, %v647
        %v669 = vadd.f32 %v615, %v649
        %v670 = vadd.f32 %v616, %v651
        %v671 = vadd.f32 %v617, %v653
        %v672 = vadd.f32 %v618, %v655
        %v673 = vadd.f32 %v619, %v657
        %v674 = vld [vmem:[%s1 + $0x3] sm:$0x1]
        %v675 = vperm.slane %v674, 0
        %v676 = vmul.f32 %v507, %v675
        %v677 = vmul.f32 %v512, %v675
        %v678 = vmul.f32 %v517, %v675
        %v679 = vmul.f32 %v522, %v675
        %v680 = vmul.f32 %v527, %v675
        %v681 = vmul.f32 %v532, %v675
        %v682 = vmul.f32 %v537, %v675
        %v683 = vmul.f32 %v542, %v675
        %v684 = vmul.f32 %v565, %v675
        %vm694 = vcmask 1044480
        %v695 = vrot.slane %v676, 3
        %v696 = vrot.slane %v677, 3
        %v697 = vsel %vm694, %v695, %v696
        %v698 = vrot.slane %v678, 3
        %v699 = vsel %vm694, %v696, %v698
        %v700 = vrot.slane %v679, 3
        %v701 = vsel %vm694, %v698, %v700
        %v702 = vrot.slane %v680, 3
        %v703 = vsel %vm694, %v700, %v702
        %v704 = vrot.slane %v681, 3
        %v705 = vsel %vm694, %v702, %v704
        %v706 = vrot.slane %v682, 3
        %v707 = vsel %vm694, %v704, %v706
        %v708 = vrot.slane %v683, 3
        %v709 = vsel %vm694, %v706, %v708
        %v710 = vrot.slane %v684, 3
        %v711 = vsel %vm694, %v708, %v710
        %v720 = vadd.f32 %v666, %v697
        %v721 = vadd.f32 %v667, %v699
        %v722 = vadd.f32 %v668, %v701
        %v723 = vadd.f32 %v669, %v703
        %v724 = vadd.f32 %v670, %v705
        %v725 = vadd.f32 %v671, %v707
        %v726 = vadd.f32 %v672, %v709
        %v727 = vadd.f32 %v673, %v711
        %v728 = vld [vmem:[%s1 + $0x4] sm:$0x1]
        %v729 = vperm.slane %v728, 0
        %v730 = vmul.f32 %v507, %v729
        %v731 = vmul.f32 %v512, %v729
        %v732 = vmul.f32 %v517, %v729
        %v733 = vmul.f32 %v522, %v729
        %v734 = vmul.f32 %v527, %v729
        %v735 = vmul.f32 %v532, %v729
        %v736 = vmul.f32 %v537, %v729
        %v737 = vmul.f32 %v542, %v729
        %v738 = vmul.f32 %v565, %v729
        %vm748 = vcmask 1043456
        %v749 = vrot.slane %v730, 4
        %v750 = vrot.slane %v731, 4
        %v751 = vsel %vm748, %v749, %v750
        %v752 = vrot.slane %v732, 4
        %v753 = vsel %vm748, %v750, %v752
        %v754 = vrot.slane %v733, 4
        %v755 = vsel %vm748, %v752, %v754
        %v756 = vrot.slane %v734, 4
        %v757 = vsel %vm748, %v754, %v756
        %v758 = vrot.slane %v735, 4
        %v759 = vsel %vm748, %v756, %v758
        %v760 = vrot.slane %v736, 4
        %v761 = vsel %vm748, %v758, %v760
        %v762 = vrot.slane %v737, 4
        %v763 = vsel %vm748, %v760, %v762
        %v764 = vrot.slane %v738, 4
        %v765 = vsel %vm748, %v762, %v764
        %v774 = vadd.f32 %v720, %v751
        %v775 = vadd.f32 %v721, %v753
        %v776 = vadd.f32 %v722, %v755
        %v777 = vadd.f32 %v723, %v757
        %v778 = vadd.f32 %v724, %v759
        %v779 = vadd.f32 %v725, %v761
        %v780 = vadd.f32 %v726, %v763
        %v781 = vadd.f32 %v727, %v765
        %v782 = vld [vmem:[%s1 + $0x5] sm:$0x1]
        %v783 = vperm.slane %v782, 0
        %v784 = vmul.f32 %v507, %v783
        %v785 = vmul.f32 %v512, %v783
        %v786 = vmul.f32 %v517, %v783
        %v787 = vmul.f32 %v522, %v783
        %v788 = vmul.f32 %v527, %v783
        %v789 = vmul.f32 %v532, %v783
        %v790 = vmul.f32 %v537, %v783
        %v791 = vmul.f32 %v542, %v783
        %v792 = vmul.f32 %v565, %v783
        %vm802 = vcmask 1042432
        %v803 = vrot.slane %v784, 5
        %v804 = vrot.slane %v785, 5
        %v805 = vsel %vm802, %v803, %v804
        %v806 = vrot.slane %v786, 5
        %v807 = vsel %vm802, %v804, %v806
        %v808 = vrot.slane %v787, 5
        %v809 = vsel %vm802, %v806, %v808
        %v810 = vrot.slane %v788, 5
        %v811 = vsel %vm802, %v808, %v810
        %v812 = vrot.slane %v789, 5
        %v813 = vsel %vm802, %v810, %v812
        %v814 = vrot.slane %v790, 5
        %v815 = vsel %vm802, %v812, %v814
        %v816 = vrot.slane %v791, 5
        %v817 = vsel %vm802, %v814, %v816
        %v818 = vrot.slane %v792, 5
        %v819 = vsel %vm802, %v816, %v818
        %v828 = vadd.f32 %v774, %v805
        %v829 = vadd.f32 %v775, %v807
        %v830 = vadd.f32 %v776, %v809
        %v831 = vadd.f32 %v777, %v811
        %v832 = vadd.f32 %v778, %v813
        %v833 = vadd.f32 %v779, %v815
        %v834 = vadd.f32 %v780, %v817
        %v835 = vadd.f32 %v781, %v819
        %v836 = vld [vmem:[%s1 + $0x6] sm:$0x1]
        %v837 = vperm.slane %v836, 0
        %v838 = vmul.f32 %v507, %v837
        %v839 = vmul.f32 %v512, %v837
        %v840 = vmul.f32 %v517, %v837
        %v841 = vmul.f32 %v522, %v837
        %v842 = vmul.f32 %v527, %v837
        %v843 = vmul.f32 %v532, %v837
        %v844 = vmul.f32 %v537, %v837
        %v845 = vmul.f32 %v542, %v837
        %v846 = vmul.f32 %v565, %v837
        %vm856 = vcmask 1041408
        %v857 = vrot.slane %v838, 6
        %v858 = vrot.slane %v839, 6
        %v859 = vsel %vm856, %v857, %v858
        %v860 = vrot.slane %v840, 6
        %v861 = vsel %vm856, %v858, %v860
        %v862 = vrot.slane %v841, 6
        %v863 = vsel %vm856, %v860, %v862
        %v864 = vrot.slane %v842, 6
        %v865 = vsel %vm856, %v862, %v864
        %v866 = vrot.slane %v843, 6
        %v867 = vsel %vm856, %v864, %v866
        %v868 = vrot.slane %v844, 6
        %v869 = vsel %vm856, %v866, %v868
        %v870 = vrot.slane %v845, 6
        %v871 = vsel %vm856, %v868, %v870
        %v872 = vrot.slane %v846, 6
        %v873 = vsel %vm856, %v870, %v872
        %v882 = vadd.f32 %v828, %v859
        %v883 = vadd.f32 %v829, %v861
        %v884 = vadd.f32 %v830, %v863
        %v885 = vadd.f32 %v831, %v865
        %v886 = vadd.f32 %v832, %v867
        %v887 = vadd.f32 %v833, %v869
        %v888 = vadd.f32 %v834, %v871
        %v889 = vadd.f32 %v835, %v873
        %v890 = vld [vmem:[%s1 + $0x7] sm:$0x1]
        %v891 = vperm.slane %v890, 0
        %v892 = vmul.f32 %v507, %v891
        %v893 = vmul.f32 %v512, %v891
        %v894 = vmul.f32 %v517, %v891
        %v895 = vmul.f32 %v522, %v891
        %v896 = vmul.f32 %v527, %v891
        %v897 = vmul.f32 %v532, %v891
        %v898 = vmul.f32 %v537, %v891
        %v899 = vmul.f32 %v542, %v891
        %v900 = vmul.f32 %v565, %v891
        %vm910 = vcmask 1040384
        %v911 = vrot.slane %v892, 7
        %v912 = vrot.slane %v893, 7
        %v913 = vsel %vm910, %v911, %v912
        %v914 = vrot.slane %v894, 7
        %v915 = vsel %vm910, %v912, %v914
        %v916 = vrot.slane %v895, 7
        %v917 = vsel %vm910, %v914, %v916
        %v918 = vrot.slane %v896, 7
        %v919 = vsel %vm910, %v916, %v918
        %v920 = vrot.slane %v897, 7
        %v921 = vsel %vm910, %v918, %v920
        %v922 = vrot.slane %v898, 7
        %v923 = vsel %vm910, %v920, %v922
        %v924 = vrot.slane %v899, 7
        %v925 = vsel %vm910, %v922, %v924
        %v926 = vrot.slane %v900, 7
        %v927 = vsel %vm910, %v924, %v926
        %v936 = vadd.f32 %v882, %v913
        %v937 = vadd.f32 %v883, %v915
        %v938 = vadd.f32 %v884, %v917
        %v939 = vadd.f32 %v885, %v919
        %v940 = vadd.f32 %v886, %v921
        %v941 = vadd.f32 %v887, %v923
        %v942 = vadd.f32 %v888, %v925
        %v943 = vadd.f32 %v889, %v927
        %v944 = vld [vmem:[%s1 + $0x8] sm:$0x1]
        %v945 = vperm.slane %v944, 0
        %v946 = vmul.f32 %v512, %v945
        %v947 = vmul.f32 %v517, %v945
        %v948 = vmul.f32 %v522, %v945
        %v949 = vmul.f32 %v527, %v945
        %v950 = vmul.f32 %v532, %v945
        %v951 = vmul.f32 %v537, %v945
        %v952 = vmul.f32 %v542, %v945
        %v953 = vmul.f32 %v565, %v945
        %v954 = vadd.f32 %v936, %v946
        %v955 = vadd.f32 %v937, %v947
        %v956 = vadd.f32 %v938, %v948
        %v957 = vadd.f32 %v939, %v949
        %v958 = vadd.f32 %v940, %v950
        %v959 = vadd.f32 %v941, %v951
        %v960 = vadd.f32 %v942, %v952
        %v961 = vadd.f32 %v943, %v953
        %v962 = vld [vmem:[%s1 + $0x9] sm:$0x1]
        %964 = vset.pattern.permute.xlu0 0
        %965 = vperm.xlu0 %964, %v502
        %v966 = vpop.permute.xlu0 %965
        %v968 = vperm.slane %v962, 0
        %v969 = vmul.f32 %v512, %v968
        %v970 = vmul.f32 %v517, %v968
        %v971 = vmul.f32 %v522, %v968
        %v972 = vmul.f32 %v527, %v968
        %v973 = vmul.f32 %v532, %v968
        %v974 = vmul.f32 %v537, %v968
        %v975 = vmul.f32 %v542, %v968
        %v976 = vmul.f32 %v565, %v968
        %v977 = vmul.f32 %v966, %v968
        %v987 = vrot.slane %v969, 1
        %v988 = vrot.slane %v970, 1
        %v989 = vsel %vm586, %v987, %v988
        %v990 = vrot.slane %v971, 1
        %v991 = vsel %vm586, %v988, %v990
        %v992 = vrot.slane %v972, 1
        %v993 = vsel %vm586, %v990, %v992
        %v994 = vrot.slane %v973, 1
        %v995 = vsel %vm586, %v992, %v994
        %v996 = vrot.slane %v974, 1
        %v997 = vsel %vm586, %v994, %v996
        %v998 = vrot.slane %v975, 1
        %v999 = vsel %vm586, %v996, %v998
        %v1000 = vrot.slane %v976, 1
        %v1001 = vsel %vm586, %v998, %v1000
        %v1002 = vrot.slane %v977, 1
        %v1003 = vsel %vm586, %v1000, %v1002
        %v1012 = vadd.f32 %v954, %v989
        %v1013 = vadd.f32 %v955, %v991
        %v1014 = vadd.f32 %v956, %v993
        %v1015 = vadd.f32 %v957, %v995
        %v1016 = vadd.f32 %v958, %v997
        %v1017 = vadd.f32 %v959, %v999
        %v1018 = vadd.f32 %v960, %v1001
        %v1019 = vadd.f32 %v961, %v1003
        %v1020 = vld [vmem:[%s1 + $0xa] sm:$0x1]
        %v1021 = vperm.slane %v1020, 0
        %v1022 = vmul.f32 %v512, %v1021
        %v1023 = vmul.f32 %v517, %v1021
        %v1024 = vmul.f32 %v522, %v1021
        %v1025 = vmul.f32 %v527, %v1021
        %v1026 = vmul.f32 %v532, %v1021
        %v1027 = vmul.f32 %v537, %v1021
        %v1028 = vmul.f32 %v542, %v1021
        %v1029 = vmul.f32 %v565, %v1021
        %v1030 = vmul.f32 %v966, %v1021
        %v1040 = vrot.slane %v1022, 2
        %v1041 = vrot.slane %v1023, 2
        %v1042 = vsel %vm640, %v1040, %v1041
        %v1043 = vrot.slane %v1024, 2
        %v1044 = vsel %vm640, %v1041, %v1043
        %v1045 = vrot.slane %v1025, 2
        %v1046 = vsel %vm640, %v1043, %v1045
        %v1047 = vrot.slane %v1026, 2
        %v1048 = vsel %vm640, %v1045, %v1047
        %v1049 = vrot.slane %v1027, 2
        %v1050 = vsel %vm640, %v1047, %v1049
        %v1051 = vrot.slane %v1028, 2
        %v1052 = vsel %vm640, %v1049, %v1051
        %v1053 = vrot.slane %v1029, 2
        %v1054 = vsel %vm640, %v1051, %v1053
        %v1055 = vrot.slane %v1030, 2
        %v1056 = vsel %vm640, %v1053, %v1055
        %v1065 = vadd.f32 %v1012, %v1042
        %v1066 = vadd.f32 %v1013, %v1044
        %v1067 = vadd.f32 %v1014, %v1046
        %v1068 = vadd.f32 %v1015, %v1048
        %v1069 = vadd.f32 %v1016, %v1050
        %v1070 = vadd.f32 %v1017, %v1052
        %v1071 = vadd.f32 %v1018, %v1054
        %v1072 = vadd.f32 %v1019, %v1056
        %v1073 = vld [vmem:[%s4] sm:$0xff]
        %v1074 = vld [vmem:[%s4 + $0x8] sm:$0xff]
        %v1075 = vld [vmem:[%s4 + $0x10] sm:$0xff]
        %v1076 = vld [vmem:[%s4 + $0x18] sm:$0xff]
        %vm1077 = vcmask 523264
        %v1079 = vsel %vm1077, %v1073, 0
        %v1082 = vsel %vm1077, %v1074, 0
        %v1085 = vsel %vm1077, %v1075, 0
        %v1088 = vsel %vm1077, %v1076, 0
        %1090 = vmatpush.msra.mxu0 0.0
        %1091 = vmatpush.msra.mxu0 0.0
        %1092 = vmatpush.msra.mxu0 0.0
        %1093 = vmatpush.msra.mxu0 0.0
        %1094 = vmatpush.msra.mxu0 0.0
        %1095 = vmatpush.msra.mxu0 0.0
        %1096 = vmatpush.msra.mxu0 0.0
        %1097 = vmatpush.msra.mxu0 0.0
        %1098 = vmatpush.msra.mxu0 %v1072
        %1099 = vmatpush.msra.mxu0 %v1071
        %1100 = vmatpush.msra.mxu0 %v1070
        %1101 = vmatpush.msra.mxu0 %v1069
        %1102 = vmatpush.msra.mxu0 %v1068
        %1103 = vmatpush.msra.mxu0 %v1067
        %1104 = vmatpush.msra.mxu0 %v1066
        %1105 = vmatpush.msra.mxu0 %v1065
        %1106 = vmatmul.f32.gmra.mxu0 %v1079
        %v1107 = vpop.f32.mrf.mxu0
        %v1108 = vadd.f32 0.0, %v1107
        %1109 = vmatmul.f32.gmra.mxu0 %v1082
        %v1110 = vpop.f32.mrf.mxu0
        %v1111 = vadd.f32 0.0, %v1110
        %1112 = vmatmul.f32.gmra.mxu0 %v1085
        %v1113 = vpop.f32.mrf.mxu0
        %v1114 = vadd.f32 0.0, %v1113
        %1115 = vmatmul.f32.gmra.mxu0 %v1088
        %v1116 = vpop.f32.mrf.mxu0
        %v1117 = vadd.f32 0.0, %v1116
        %1118 = vdwg.mxu0
        %v1119 = vld [vmem:[%s2] sm:$0x1]
        %v1121 = vperm.slane %v1119, 0
        %v1123 = vmul.f32 %v1108, %v1121
        %v1124 = vmul.f32 %v1111, %v1121
        %v1125 = vmul.f32 %v1114, %v1121
        %v1126 = vmul.f32 %v1117, %v1121
        %v1127 = vld [vmem:[%s3] sm:$0x1]
        %v1129 = vperm.slane %v1127, 0
        %v1131 = vadd.f32 %v1123, %v1129
        %v1132 = vadd.f32 %v1124, %v1129
        %v1133 = vadd.f32 %v1125, %v1129
        %v1134 = vadd.f32 %v1126, %v1129
        %v1135 = vmax.f32 %v1131, 0.0
        %v1136 = vmax.f32 %v1132, 0.0
        %v1137 = vmax.f32 %v1133, 0.0
        %v1138 = vmax.f32 %v1134, 0.0
        %v1139 = vld [vmem:[%s5] sm:$0xff]
        %v1140 = vld [vmem:[%s5 + $0x8] sm:$0xff]
        %v1141 = vld [vmem:[%s5 + $0x10] sm:$0xff]
        %v1142 = vld [vmem:[%s5 + $0x18] sm:$0xff]
        %v1148 = vrot.slane 0.0, 4
        %v1149 = vrot.slane %v1135, 4
        %v1150 = vsel %vm748, %v1148, %v1149
        %v1151 = vrot.slane %v1136, 4
        %v1152 = vsel %vm748, %v1149, %v1151
        %v1153 = vrot.slane %v1137, 4
        %v1154 = vsel %vm748, %v1151, %v1153
        %v1155 = vrot.slane %v1138, 4
        %v1156 = vsel %vm748, %v1153, %v1155
        %vm1157 = vcmask 130048
        %v1158 = vsel %vm1157, %v1150, 0
        %v1160 = vsel %vm1157, %v1152, 0
        %v1162 = vsel %vm1157, %v1154, 0
        %v1164 = vsel %vm1157, %v1156, 0
        %1166 = vmatpush.msra.mxu0 0.0
        %1167 = vmatpush.msra.mxu0 0.0
        %1168 = vmatpush.msra.mxu0 0.0
        %1169 = vmatpush.msra.mxu0 0.0
        %1170 = vmatpush.msra.mxu0 0.0
        %1171 = vmatpush.msra.mxu0 0.0
        %1172 = vmatpush.msra.mxu0 0.0
        %1173 = vmatpush.msra.mxu0 0.0
        %1174 = vmatpush.msra.mxu0 0.0
        %1175 = vmatpush.msra.mxu0 0.0
        %1176 = vmatpush.msra.mxu0 0.0
        %1177 = vmatpush.msra.mxu0 0.0
        %1178 = vmatpush.msra.mxu0 0.0
        %1179 = vmatpush.msra.mxu0 0.0
        %1180 = vmatpush.msra.mxu0 %v1142
        %1181 = vmatpush.msra.mxu0 %v1141
        %1182 = vmatmul.f32.gmra.mxu0 %v1158
        %v1183 = vpop.f32.mrf.mxu0
        %v1184 = vadd.f32 0.0, %v1183
        %1185 = vmatmul.f32.gmra.mxu0 %v1160
        %v1186 = vpop.f32.mrf.mxu0
        %v1187 = vadd.f32 0.0, %v1186
        %1188 = vmatmul.f32.gmra.mxu0 %v1162
        %v1189 = vpop.f32.mrf.mxu0
        %v1190 = vadd.f32 0.0, %v1189
        %1191 = vmatmul.f32.gmra.mxu0 %v1164
        %v1192 = vpop.f32.mrf.mxu0
        %v1193 = vadd.f32 0.0, %v1192
        %1194 = vdwg.mxu0
        %v1195 = vrot.slane 0.0, 3
        %v1196 = vrot.slane %v1135, 3
        %v1197 = vsel %vm694, %v1195, %v1196
        %v1198 = vrot.slane %v1136, 3
        %v1199 = vsel %vm694, %v1196, %v1198
        %v1200 = vrot.slane %v1137, 3
        %v1201 = vsel %vm694, %v1198, %v1200
        %v1202 = vrot.slane %v1138, 3
        %v1203 = vsel %vm694, %v1200, %v1202
        %v1204 = vsel %vm1157, %v1197, 0
        %v1206 = vsel %vm1157, %v1199, 0
        %v1208 = vsel %vm1157, %v1201, 0
        %v1210 = vsel %vm1157, %v1203, 0
        %1212 = vmatpush.msra.mxu0 0.0
        %1213 = vmatpush.msra.mxu0 0.0
        %1214 = vmatpush.msra.mxu0 0.0
        %1215 = vmatpush.msra.mxu0 0.0
        %1216 = vmatpush.msra.mxu0 0.0
        %1217 = vmatpush.msra.mxu0 0.0
        %1218 = vmatpush.msra.mxu0 0.0
        %1219 = vmatpush.msra.mxu0 0.0
        %1220 = vmatpush.msra.mxu0 0.0
        %1221 = vmatpush.msra.mxu0 0.0
        %1222 = vmatpush.msra.mxu0 0.0
        %1223 = vmatpush.msra.mxu0 0.0
        %1224 = vmatpush.msra.mxu0 0.0
        %1225 = vmatpush.msra.mxu0 0.0
        %1226 = vmatpush.msra.mxu0 %v1140
        %1227 = vmatpush.msra.mxu0 %v1139
        %1228 = vmatmul.f32.gmra.mxu0 %v1204
        %v1229 = vpop.f32.mrf.mxu0
        %v1230 = vadd.f32 %v1184, %v1229
        %1231 = vmatmul.f32.gmra.mxu0 %v1206
        %v1232 = vpop.f32.mrf.mxu0
        %v1233 = vadd.f32 %v1187, %v1232
        %1234 = vmatmul.f32.gmra.mxu0 %v1208
        %v1235 = vpop.f32.mrf.mxu0
        %v1236 = vadd.f32 %v1190, %v1235
        %1237 = vmatmul.f32.gmra.mxu0 %v1210
        %v1238 = vpop.f32.mrf.mxu0
        %v1239 = vadd.f32 %v1193, %v1238
        %1240 = vdwg.mxu0
        %v1241 = vld [vmem:[%s5 + $0x20] sm:$0xff]
        %v1242 = vld [vmem:[%s5 + $0x28] sm:$0xff]
        %v1243 = vrot.slane 0.0, 5
        %v1244 = vrot.slane %v1135, 5
        %v1245 = vsel %vm802, %v1243, %v1244
        %v1246 = vrot.slane %v1136, 5
        %v1247 = vsel %vm802, %v1244, %v1246
        %v1248 = vrot.slane %v1137, 5
        %v1249 = vsel %vm802, %v1246, %v1248
        %v1250 = vrot.slane %v1138, 5
        %v1251 = vsel %vm802, %v1248, %v1250
        %v1252 = vsel %vm1157, %v1245, 0
        %v1254 = vsel %vm1157, %v1247, 0
        %v1256 = vsel %vm1157, %v1249, 0
        %v1258 = vsel %vm1157, %v1251, 0
        %1260 = vmatpush.msra.mxu0 0.0
        %1261 = vmatpush.msra.mxu0 0.0
        %1262 = vmatpush.msra.mxu0 0.0
        %1263 = vmatpush.msra.mxu0 0.0
        %1264 = vmatpush.msra.mxu0 0.0
        %1265 = vmatpush.msra.mxu0 0.0
        %1266 = vmatpush.msra.mxu0 0.0
        %1267 = vmatpush.msra.mxu0 0.0
        %1268 = vmatpush.msra.mxu0 0.0
        %1269 = vmatpush.msra.mxu0 0.0
        %1270 = vmatpush.msra.mxu0 0.0
        %1271 = vmatpush.msra.mxu0 0.0
        %1272 = vmatpush.msra.mxu0 0.0
        %1273 = vmatpush.msra.mxu0 0.0
        %1274 = vmatpush.msra.mxu0 %v1242
        %1275 = vmatpush.msra.mxu0 %v1241
        %1276 = vmatmul.f32.gmra.mxu0 %v1252
        %v1277 = vpop.f32.mrf.mxu0
        %v1278 = vadd.f32 0.0, %v1277
        %1279 = vmatmul.f32.gmra.mxu0 %v1254
        %v1280 = vpop.f32.mrf.mxu0
        %v1281 = vadd.f32 0.0, %v1280
        %1282 = vmatmul.f32.gmra.mxu0 %v1256
        %v1283 = vpop.f32.mrf.mxu0
        %v1284 = vadd.f32 0.0, %v1283
        %1285 = vmatmul.f32.gmra.mxu0 %v1258
        %v1286 = vpop.f32.mrf.mxu0
        %v1287 = vadd.f32 0.0, %v1286
        %1288 = vdwg.mxu0
        %v1289 = vadd.f32 %v1230, %v1278
        %v1290 = vadd.f32 %v1233, %v1281
        %v1291 = vadd.f32 %v1236, %v1284
        %v1292 = vadd.f32 %v1239, %v1287
        %v1293 = vld [vmem:[%s5 + $0x30] sm:$0xff]
        %v1294 = vld [vmem:[%s5 + $0x38] sm:$0xff]
        %v1295 = vrot.slane 0.0, 6
        %v1296 = vrot.slane %v1135, 6
        %v1297 = vsel %vm856, %v1295, %v1296
        %v1298 = vrot.slane %v1136, 6
        %v1299 = vsel %vm856, %v1296, %v1298
        %v1300 = vrot.slane %v1137, 6
        %v1301 = vsel %vm856, %v1298, %v1300
        %v1302 = vrot.slane %v1138, 6
        %v1303 = vsel %vm856, %v1300, %v1302
        %v1304 = vsel %vm1157, %v1297, 0
        %v1306 = vsel %vm1157, %v1299, 0
        %v1308 = vsel %vm1157, %v1301, 0
        %v1310 = vsel %vm1157, %v1303, 0
        %1312 = vmatpush.msra.mxu0 0.0
        %1313 = vmatpush.msra.mxu0 0.0
        %1314 = vmatpush.msra.mxu0 0.0
        %1315 = vmatpush.msra.mxu0 0.0
        %1316 = vmatpush.msra.mxu0 0.0
        %1317 = vmatpush.msra.mxu0 0.0
        %1318 = vmatpush.msra.mxu0 0.0
        %1319 = vmatpush.msra.mxu0 0.0
        %1320 = vmatpush.msra.mxu0 0.0
        %1321 = vmatpush.msra.mxu0 0.0
        %1322 = vmatpush.msra.mxu0 0.0
        %1323 = vmatpush.msra.mxu0 0.0
        %1324 = vmatpush.msra.mxu0 0.0
        %1325 = vmatpush.msra.mxu0 0.0
        %1326 = vmatpush.msra.mxu0 %v1294
        %1327 = vmatpush.msra.mxu0 %v1293
        %1328 = vmatmul.f32.gmra.mxu0 %v1304
        %v1329 = vpop.f32.mrf.mxu0
        %v1330 = vadd.f32 0.0, %v1329
        %1331 = vmatmul.f32.gmra.mxu0 %v1306
        %v1332 = vpop.f32.mrf.mxu0
        %v1333 = vadd.f32 0.0, %v1332
        %1334 = vmatmul.f32.gmra.mxu0 %v1308
        %v1335 = vpop.f32.mrf.mxu0
        %v1336 = vadd.f32 0.0, %v1335
        %1337 = vmatmul.f32.gmra.mxu0 %v1310
        %v1338 = vpop.f32.mrf.mxu0
        %v1339 = vadd.f32 0.0, %v1338
        %1340 = vdwg.mxu0
        %v1341 = vadd.f32 %v1289, %v1330
        %v1342 = vadd.f32 %v1290, %v1333
        %v1343 = vadd.f32 %v1291, %v1336
        %v1344 = vadd.f32 %v1292, %v1339
        %v1345 = vld [vmem:[%s5 + $0x40] sm:$0xff]
        %v1346 = vld [vmem:[%s5 + $0x48] sm:$0xff]
        %v1347 = vrot.slane 0.0, 7
        %v1348 = vrot.slane %v1135, 7
        %v1349 = vsel %vm910, %v1347, %v1348
        %v1350 = vrot.slane %v1136, 7
        %v1351 = vsel %vm910, %v1348, %v1350
        %v1352 = vrot.slane %v1137, 7
        %v1353 = vsel %vm910, %v1350, %v1352
        %v1354 = vrot.slane %v1138, 7
        %v1355 = vsel %vm910, %v1352, %v1354
        %v1356 = vsel %vm1157, %v1349, 0
        %v1358 = vsel %vm1157, %v1351, 0
        %v1360 = vsel %vm1157, %v1353, 0
        %v1362 = vsel %vm1157, %v1355, 0
        %1364 = vmatpush.msra.mxu0 0.0
        %1365 = vmatpush.msra.mxu0 0.0
        %1366 = vmatpush.msra.mxu0 0.0
        %1367 = vmatpush.msra.mxu0 0.0
        %1368 = vmatpush.msra.mxu0 0.0
        %1369 = vmatpush.msra.mxu0 0.0
        %1370 = vmatpush.msra.mxu0 0.0
        %1371 = vmatpush.msra.mxu0 0.0
        %1372 = vmatpush.msra.mxu0 0.0
        %1373 = vmatpush.msra.mxu0 0.0
        %1374 = vmatpush.msra.mxu0 0.0
        %1375 = vmatpush.msra.mxu0 0.0
        %1376 = vmatpush.msra.mxu0 0.0
        %1377 = vmatpush.msra.mxu0 0.0
        %1378 = vmatpush.msra.mxu0 %v1346
        %1379 = vmatpush.msra.mxu0 %v1345
        %1380 = vmatmul.f32.gmra.mxu0 %v1356
        %v1381 = vpop.f32.mrf.mxu0
        %v1382 = vadd.f32 0.0, %v1381
        %1383 = vmatmul.f32.gmra.mxu0 %v1358
        %v1384 = vpop.f32.mrf.mxu0
        %v1385 = vadd.f32 0.0, %v1384
        %1386 = vmatmul.f32.gmra.mxu0 %v1360
        %v1387 = vpop.f32.mrf.mxu0
        %v1388 = vadd.f32 0.0, %v1387
        %1389 = vmatmul.f32.gmra.mxu0 %v1362
        %v1390 = vpop.f32.mrf.mxu0
        %v1391 = vadd.f32 0.0, %v1390
        %1392 = vdwg.mxu0
        %v1393 = vadd.f32 %v1341, %v1382
        %v1394 = vadd.f32 %v1342, %v1385
        %v1395 = vadd.f32 %v1343, %v1388
        %v1396 = vadd.f32 %v1344, %v1391
        %v1397 = vld [vmem:[%s5 + $0x50] sm:$0xff]
        %v1398 = vld [vmem:[%s5 + $0x58] sm:$0xff]
        %v1399 = vsel %vm1157, %v1135, 0
        %v1401 = vsel %vm1157, %v1136, 0
        %v1403 = vsel %vm1157, %v1137, 0
        %v1405 = vsel %vm1157, %v1138, 0
        %1407 = vmatpush.msra.mxu0 0.0
        %1408 = vmatpush.msra.mxu0 0.0
        %1409 = vmatpush.msra.mxu0 0.0
        %1410 = vmatpush.msra.mxu0 0.0
        %1411 = vmatpush.msra.mxu0 0.0
        %1412 = vmatpush.msra.mxu0 0.0
        %1413 = vmatpush.msra.mxu0 0.0
        %1414 = vmatpush.msra.mxu0 0.0
        %1415 = vmatpush.msra.mxu0 0.0
        %1416 = vmatpush.msra.mxu0 0.0
        %1417 = vmatpush.msra.mxu0 0.0
        %1418 = vmatpush.msra.mxu0 0.0
        %1419 = vmatpush.msra.mxu0 0.0
        %1420 = vmatpush.msra.mxu0 0.0
        %1421 = vmatpush.msra.mxu0 %v1398
        %1422 = vmatpush.msra.mxu0 %v1397
        %1423 = vmatmul.f32.gmra.mxu0 %v1399
        %v1424 = vpop.f32.mrf.mxu0
        %v1425 = vadd.f32 0.0, %v1424
        %1426 = vmatmul.f32.gmra.mxu0 %v1401
        %v1427 = vpop.f32.mrf.mxu0
        %v1428 = vadd.f32 0.0, %v1427
        %1429 = vmatmul.f32.gmra.mxu0 %v1403
        %v1430 = vpop.f32.mrf.mxu0
        %v1431 = vadd.f32 0.0, %v1430
        %1432 = vmatmul.f32.gmra.mxu0 %v1405
        %v1433 = vpop.f32.mrf.mxu0
        %v1434 = vadd.f32 0.0, %v1433
        %1435 = vdwg.mxu0
        %v1436 = vadd.f32 %v1393, %v1425
        %v1437 = vadd.f32 %v1394, %v1428
        %v1438 = vadd.f32 %v1395, %v1431
        %v1439 = vadd.f32 %v1396, %v1434
        %v1440 = vld [vmem:[%s5 + $0x60] sm:$0xff]
        %v1441 = vld [vmem:[%s5 + $0x68] sm:$0xff]
        %v1442 = vrot.slane %v1135, 1
        %v1443 = vrot.slane %v1136, 1
        %v1444 = vsel %vm586, %v1442, %v1443
        %v1445 = vrot.slane %v1137, 1
        %v1446 = vsel %vm586, %v1443, %v1445
        %v1447 = vrot.slane %v1138, 1
        %v1448 = vsel %vm586, %v1445, %v1447
        %v1449 = vrot.slane 0.0, 1
        %v1450 = vsel %vm586, %v1447, %v1449
        %v1451 = vsel %vm1157, %v1444, 0
        %v1453 = vsel %vm1157, %v1446, 0
        %v1455 = vsel %vm1157, %v1448, 0
        %v1457 = vsel %vm1157, %v1450, 0
        %1459 = vmatpush.msra.mxu0 0.0
        %1460 = vmatpush.msra.mxu0 0.0
        %1461 = vmatpush.msra.mxu0 0.0
        %1462 = vmatpush.msra.mxu0 0.0
        %1463 = vmatpush.msra.mxu0 0.0
        %1464 = vmatpush.msra.mxu0 0.0
        %1465 = vmatpush.msra.mxu0 0.0
        %1466 = vmatpush.msra.mxu0 0.0
        %1467 = vmatpush.msra.mxu0 0.0
        %1468 = vmatpush.msra.mxu0 0.0
        %1469 = vmatpush.msra.mxu0 0.0
        %1470 = vmatpush.msra.mxu0 0.0
        %1471 = vmatpush.msra.mxu0 0.0
        %1472 = vmatpush.msra.mxu0 0.0
        %1473 = vmatpush.msra.mxu0 %v1441
        %1474 = vmatpush.msra.mxu0 %v1440
        %1475 = vmatmul.f32.gmra.mxu0 %v1451
        %v1476 = vpop.f32.mrf.mxu0
        %v1477 = vadd.f32 0.0, %v1476
        %1478 = vmatmul.f32.gmra.mxu0 %v1453
        %v1479 = vpop.f32.mrf.mxu0
        %v1480 = vadd.f32 0.0, %v1479
        %1481 = vmatmul.f32.gmra.mxu0 %v1455
        %v1482 = vpop.f32.mrf.mxu0
        %v1483 = vadd.f32 0.0, %v1482
        %1484 = vmatmul.f32.gmra.mxu0 %v1457
        %v1485 = vpop.f32.mrf.mxu0
        %v1486 = vadd.f32 0.0, %v1485
        %1487 = vdwg.mxu0
        %v1488 = vadd.f32 %v1436, %v1477
        %v1489 = vadd.f32 %v1437, %v1480
        %v1490 = vadd.f32 %v1438, %v1483
        %v1491 = vadd.f32 %v1439, %v1486
        %v1492 = vld [vmem:[%s5 + $0x70] sm:$0xff]
        %v1493 = vld [vmem:[%s5 + $0x78] sm:$0xff]
        %v1494 = vrot.slane %v1135, 2
        %v1495 = vrot.slane %v1136, 2
        %v1496 = vsel %vm640, %v1494, %v1495
        %v1497 = vrot.slane %v1137, 2
        %v1498 = vsel %vm640, %v1495, %v1497
        %v1499 = vrot.slane %v1138, 2
        %v1500 = vsel %vm640, %v1497, %v1499
        %v1501 = vrot.slane 0.0, 2
        %v1502 = vsel %vm640, %v1499, %v1501
        %v1503 = vsel %vm1157, %v1496, 0
        %v1505 = vsel %vm1157, %v1498, 0
        %v1507 = vsel %vm1157, %v1500, 0
        %v1509 = vsel %vm1157, %v1502, 0
        %1511 = vmatpush.msra.mxu0 0.0
        %1512 = vmatpush.msra.mxu0 0.0
        %1513 = vmatpush.msra.mxu0 0.0
        %1514 = vmatpush.msra.mxu0 0.0
        %1515 = vmatpush.msra.mxu0 0.0
        %1516 = vmatpush.msra.mxu0 0.0
        %1517 = vmatpush.msra.mxu0 0.0
        %1518 = vmatpush.msra.mxu0 0.0
        %1519 = vmatpush.msra.mxu0 0.0
        %1520 = vmatpush.msra.mxu0 0.0
        %1521 = vmatpush.msra.mxu0 0.0
        %1522 = vmatpush.msra.mxu0 0.0
        %1523 = vmatpush.msra.mxu0 0.0
        %1524 = vmatpush.msra.mxu0 0.0
        %1525 = vmatpush.msra.mxu0 %v1493
        %1526 = vmatpush.msra.mxu0 %v1492
        %1527 = vmatmul.f32.gmra.mxu0 %v1503
        %v1528 = vpop.f32.mrf.mxu0
        %v1529 = vadd.f32 0.0, %v1528
        %1530 = vmatmul.f32.gmra.mxu0 %v1505
        %v1531 = vpop.f32.mrf.mxu0
        %v1532 = vadd.f32 0.0, %v1531
        %1533 = vmatmul.f32.gmra.mxu0 %v1507
        %v1534 = vpop.f32.mrf.mxu0
        %v1535 = vadd.f32 0.0, %v1534
        %1536 = vmatmul.f32.gmra.mxu0 %v1509
        %v1537 = vpop.f32.mrf.mxu0
        %v1538 = vadd.f32 0.0, %v1537
        %1539 = vdwg.mxu0
        %v1540 = vadd.f32 %v1488, %v1529
        %v1541 = vadd.f32 %v1489, %v1532
        %v1542 = vadd.f32 %v1490, %v1535
        %v1543 = vadd.f32 %v1491, %v1538
        %v1544 = vld [vmem:[%s5 + $0x80] sm:$0xff]
        %v1545 = vld [vmem:[%s5 + $0x88] sm:$0xff]
        %v1546 = vsel %vm694, %v1202, %v1195
        %v1547 = vsel %vm1157, %v1546, 0
        %1549 = vmatpush.msra.mxu0 0.0
        %1550 = vmatpush.msra.mxu0 0.0
        %1551 = vmatpush.msra.mxu0 0.0
        %1552 = vmatpush.msra.mxu0 0.0
        %1553 = vmatpush.msra.mxu0 0.0
        %1554 = vmatpush.msra.mxu0 0.0
        %1555 = vmatpush.msra.mxu0 0.0
        %1556 = vmatpush.msra.mxu0 0.0
        %1557 = vmatpush.msra.mxu0 0.0
        %1558 = vmatpush.msra.mxu0 0.0
        %1559 = vmatpush.msra.mxu0 0.0
        %1560 = vmatpush.msra.mxu0 0.0
        %1561 = vmatpush.msra.mxu0 0.0
        %1562 = vmatpush.msra.mxu0 0.0
        %1563 = vmatpush.msra.mxu0 %v1545
        %1564 = vmatpush.msra.mxu0 %v1544
        %1565 = vmatmul.f32.gmra.mxu0 %v1206
        %v1566 = vpop.f32.mrf.mxu0
        %v1567 = vadd.f32 0.0, %v1566
        %1568 = vmatmul.f32.gmra.mxu0 %v1208
        %v1569 = vpop.f32.mrf.mxu0
        %v1570 = vadd.f32 0.0, %v1569
        %1571 = vmatmul.f32.gmra.mxu0 %v1210
        %v1572 = vpop.f32.mrf.mxu0
        %v1573 = vadd.f32 0.0, %v1572
        %1574 = vmatmul.f32.gmra.mxu0 %v1547
        %v1575 = vpop.f32.mrf.mxu0
        %v1576 = vadd.f32 0.0, %v1575
        %1577 = vdwg.mxu0
        %v1578 = vadd.f32 %v1540, %v1567
        %v1579 = vadd.f32 %v1541, %v1570
        %v1580 = vadd.f32 %v1542, %v1573
        %v1581 = vadd.f32 %v1543, %v1576
        %v1582 = vld [vmem:[%s5 + $0x90] sm:$0xff]
        %v1583 = vld [vmem:[%s5 + $0x98] sm:$0xff]
        %v1584 = vsel %vm748, %v1155, %v1148
        %v1585 = vsel %vm1157, %v1584, 0
        %1587 = vmatpush.msra.mxu0 0.0
        %1588 = vmatpush.msra.mxu0 0.0
        %1589 = vmatpush.msra.mxu0 0.0
        %1590 = vmatpush.msra.mxu0 0.0
        %1591 = vmatpush.msra.mxu0 0.0
        %1592 = vmatpush.msra.mxu0 0.0
        %1593 = vmatpush.msra.mxu0 0.0
        %1594 = vmatpush.msra.mxu0 0.0
        %1595 = vmatpush.msra.mxu0 0.0
        %1596 = vmatpush.msra.mxu0 0.0
        %1597 = vmatpush.msra.mxu0 0.0
        %1598 = vmatpush.msra.mxu0 0.0
        %1599 = vmatpush.msra.mxu0 0.0
        %1600 = vmatpush.msra.mxu0 0.0
        %1601 = vmatpush.msra.mxu0 %v1583
        %1602 = vmatpush.msra.mxu0 %v1582
        %1603 = vmatmul.f32.gmra.mxu0 %v1160
        %v1604 = vpop.f32.mrf.mxu0
        %v1605 = vadd.f32 0.0, %v1604
        %1606 = vmatmul.f32.gmra.mxu0 %v1162
        %v1607 = vpop.f32.mrf.mxu0
        %v1608 = vadd.f32 0.0, %v1607
        %1609 = vmatmul.f32.gmra.mxu0 %v1164
        %v1610 = vpop.f32.mrf.mxu0
        %v1611 = vadd.f32 0.0, %v1610
        %1612 = vmatmul.f32.gmra.mxu0 %v1585
        %v1613 = vpop.f32.mrf.mxu0
        %v1614 = vadd.f32 0.0, %v1613
        %1615 = vdwg.mxu0
        %v1616 = vadd.f32 %v1578, %v1605
        %v1617 = vadd.f32 %v1579, %v1608
        %v1618 = vadd.f32 %v1580, %v1611
        %v1619 = vadd.f32 %v1581, %v1614
        %v1620 = vld [vmem:[%s5 + $0xa0] sm:$0xff]
        %v1621 = vld [vmem:[%s5 + $0xa8] sm:$0xff]
        %v1622 = vsel %vm802, %v1250, %v1243
        %v1623 = vsel %vm1157, %v1622, 0
        %1625 = vmatpush.msra.mxu0 0.0
        %1626 = vmatpush.msra.mxu0 0.0
        %1627 = vmatpush.msra.mxu0 0.0
        %1628 = vmatpush.msra.mxu0 0.0
        %1629 = vmatpush.msra.mxu0 0.0
        %1630 = vmatpush.msra.mxu0 0.0
        %1631 = vmatpush.msra.mxu0 0.0
        %1632 = vmatpush.msra.mxu0 0.0
        %1633 = vmatpush.msra.mxu0 0.0
        %1634 = vmatpush.msra.mxu0 0.0
        %1635 = vmatpush.msra.mxu0 0.0
        %1636 = vmatpush.msra.mxu0 0.0
        %1637 = vmatpush.msra.mxu0 0.0
        %1638 = vmatpush.msra.mxu0 0.0
        %1639 = vmatpush.msra.mxu0 %v1621
        %1640 = vmatpush.msra.mxu0 %v1620
        %1641 = vmatmul.f32.gmra.mxu0 %v1254
        %v1642 = vpop.f32.mrf.mxu0
        %v1643 = vadd.f32 0.0, %v1642
        %1644 = vmatmul.f32.gmra.mxu0 %v1256
        %v1645 = vpop.f32.mrf.mxu0
        %v1646 = vadd.f32 0.0, %v1645
        %1647 = vmatmul.f32.gmra.mxu0 %v1258
        %v1648 = vpop.f32.mrf.mxu0
        %v1649 = vadd.f32 0.0, %v1648
        %1650 = vmatmul.f32.gmra.mxu0 %v1623
        %v1651 = vpop.f32.mrf.mxu0
        %v1652 = vadd.f32 0.0, %v1651
        %1653 = vdwg.mxu0
        %v1654 = vadd.f32 %v1616, %v1643
        %v1655 = vadd.f32 %v1617, %v1646
        %v1656 = vadd.f32 %v1618, %v1649
        %v1657 = vadd.f32 %v1619, %v1652
        %v1658 = vld [vmem:[%s8] sm:$0xff]
        %v1659 = vld [vmem:[%s8 + $0x8] sm:$0xff]
        %vm1660 = vcmask 261120
        %v1662 = vsel %vm1660, %v1658, 0
        %v1665 = vsel %vm1660, %v1659, 0
        %1667 = vmatpush.msra.mxu0 0.0
        %1668 = vmatpush.msra.mxu0 0.0
        %1669 = vmatpush.msra.mxu0 0.0
        %1670 = vmatpush.msra.mxu0 0.0
        %1671 = vmatpush.msra.mxu0 0.0
        %1672 = vmatpush.msra.mxu0 0.0
        %1673 = vmatpush.msra.mxu0 0.0
        %1674 = vmatpush.msra.mxu0 0.0
        %1675 = vmatpush.msra.mxu0 0.0
        %1676 = vmatpush.msra.mxu0 0.0
        %1677 = vmatpush.msra.mxu0 0.0
        %1678 = vmatpush.msra.mxu0 0.0
        %1679 = vmatpush.msra.mxu0 %v1657
        %1680 = vmatpush.msra.mxu0 %v1656
        %1681 = vmatpush.msra.mxu0 %v1655
        %1682 = vmatpush.msra.mxu0 %v1654
        %1683 = vmatmul.f32.gmra.mxu0 %v1662
        %v1684 = vpop.f32.mrf.mxu0
        %v1685 = vadd.f32 0.0, %v1684
        %1686 = vmatmul.f32.gmra.mxu0 %v1665
        %v1687 = vpop.f32.mrf.mxu0
        %v1688 = vadd.f32 0.0, %v1687
        %1689 = vdwg.mxu0
        %v1690 = vld [vmem:[%s6] sm:$0x1]
        %v1692 = vperm.slane %v1690, 0
        %v1694 = vmul.f32 %v1685, %v1692
        %v1695 = vmul.f32 %v1688, %v1692
        %v1696 = vld [vmem:[%s7] sm:$0x1]
        %v1698 = vperm.slane %v1696, 0
        %v1700 = vadd.f32 %v1694, %v1698
        %v1701 = vadd.f32 %v1695, %v1698
        %v1702 = vmax.f32 %v1700, 0.0
        %v1703 = vmax.f32 %v1701, 0.0
        %v1704 = vld [vmem:[%s9] sm:$0xff]
        %v1705 = vld [vmem:[%s9 + $0x8] sm:$0xff]
        %v1706 = vld [vmem:[%s9 + $0x10] sm:$0xff]
        %v1707 = vld [vmem:[%s9 + $0x18] sm:$0xff]
        %v1708 = vld [vmem:[%s10] sm:$0x1]
        %v1710 = vperm.slane %v1708, 0
        %v1713 = vsel %vm1660, %v1702, 0
        %v1716 = vsel %vm1660, %v1703, 0
        %1718 = vmatpush.msra.mxu0 0.0
        %1719 = vmatpush.msra.mxu0 0.0
        %1720 = vmatpush.msra.mxu0 0.0
        %1721 = vmatpush.msra.mxu0 0.0
        %1722 = vmatpush.msra.mxu0 0.0
        %1723 = vmatpush.msra.mxu0 0.0
        %1724 = vmatpush.msra.mxu0 0.0
        %1725 = vmatpush.msra.mxu0 0.0
        %1726 = vmatpush.msra.mxu0 0.0
        %1727 = vmatpush.msra.mxu0 0.0
        %1728 = vmatpush.msra.mxu0 0.0
        %1729 = vmatpush.msra.mxu0 0.0
        %1730 = vmatpush.msra.mxu0 %v1707
        %1731 = vmatpush.msra.mxu0 %v1706
        %1732 = vmatpush.msra.mxu0 %v1705
        %1733 = vmatpush.msra.mxu0 %v1704
        %1734 = vmatmul.f32.gmra.mxu0 %v1713
        %v1735 = vpop.f32.mrf.mxu0
        %v1736 = vadd.f32 %v1710, %v1735
        %1737 = vmatmul.f32.gmra.mxu0 %v1716
        %v1738 = vpop.f32.mrf.mxu0
        %v1739 = vadd.f32 %v1710, %v1738
        %1740 = vdwg.mxu0
        %v1741 = vld [vmem:[%s11] sm:$0x1]
        %v1742 = vperm.slane %v1741, 0
        %v1743 = vmul.f32 %v1742, 0.0
        %v1744 = vmul.f32 %v1736, %v1742
        %v1745 = vmul.f32 %v1739, %v1742
        %v1746 = vadd.f32 %v1743, 0.0
        %v1747 = vadd.f32 %v1744, 0.0
        %v1748 = vadd.f32 %v1745, 0.0
        %v1749 = vld [vmem:[%s11 + $0x1] sm:$0x1]
        %v1750 = vperm.slane %v1749, 0
        %v1751 = vmul.f32 %v1750, 0.0
        %v1752 = vmul.f32 %v1736, %v1750
        %v1753 = vmul.f32 %v1739, %v1750
        %v1757 = vrot.slane %v1751, 1
        %v1758 = vrot.slane %v1752, 1
        %v1759 = vsel %vm586, %v1757, %v1758
        %v1760 = vrot.slane %v1753, 1
        %v1761 = vsel %vm586, %v1758, %v1760
        %v1765 = vadd.f32 %v1746, %v1759
        %v1766 = vadd.f32 %v1747, %v1761
        %v1767 = vadd.f32 %v1748, %v1760
        %v1768 = vld [vmem:[%s11 + $0x2] sm:$0x1]
        %v1769 = vperm.slane %v1768, 0
        %v1770 = vmul.f32 %v1769, 0.0
        %v1771 = vmul.f32 %v1736, %v1769
        %v1772 = vmul.f32 %v1739, %v1769
        %v1776 = vrot.slane %v1770, 2
        %v1777 = vrot.slane %v1771, 2
        %v1778 = vsel %vm640, %v1776, %v1777
        %v1779 = vrot.slane %v1772, 2
        %v1780 = vsel %vm640, %v1777, %v1779
        %v1784 = vadd.f32 %v1765, %v1778
        %v1785 = vadd.f32 %v1766, %v1780
        %v1786 = vadd.f32 %v1767, %v1779
        %v1787 = vld [vmem:[%s11 + $0x3] sm:$0x1]
        %v1788 = vperm.slane %v1787, 0
        %v1789 = vmul.f32 %v1788, 0.0
        %v1790 = vmul.f32 %v1736, %v1788
        %v1791 = vmul.f32 %v1739, %v1788
        %v1795 = vrot.slane %v1789, 3
        %v1796 = vrot.slane %v1790, 3
        %v1797 = vsel %vm694, %v1795, %v1796
        %v1798 = vrot.slane %v1791, 3
        %v1799 = vsel %vm694, %v1796, %v1798
        %v1803 = vadd.f32 %v1784, %v1797
        %v1804 = vadd.f32 %v1785, %v1799
        %v1805 = vadd.f32 %v1786, %v1798
        %v1806 = vld [vmem:[%s11 + $0x4] sm:$0x1]
        %v1807 = vperm.slane %v1806, 0
        %v1808 = vmul.f32 %v1807, 0.0
        %v1809 = vmul.f32 %v1736, %v1807
        %v1810 = vmul.f32 %v1739, %v1807
        %v1814 = vrot.slane %v1808, 4
        %v1815 = vrot.slane %v1809, 4
        %v1816 = vsel %vm748, %v1814, %v1815
        %v1817 = vrot.slane %v1810, 4
        %v1818 = vsel %vm748, %v1815, %v1817
        %v1822 = vadd.f32 %v1803, %v1816
        %v1823 = vadd.f32 %v1804, %v1818
        %v1824 = vadd.f32 %v1805, %v1817
        %v1825 = vld [vmem:[%s11 + $0x5] sm:$0x1]
        %v1826 = vperm.slane %v1825, 0
        %v1827 = vmul.f32 %v1736, %v1826
        %v1828 = vmul.f32 %v1739, %v1826
        %v1831 = vrot.slane %v1827, 5
        %v1832 = vrot.slane %v1828, 5
        %v1833 = vsel %vm802, %v1831, %v1832
        %v1837 = vadd.f32 %v1822, %v1831
        %v1838 = vadd.f32 %v1823, %v1833
        %v1839 = vadd.f32 %v1824, %v1832
        %v1840 = vld [vmem:[%s11 + $0x6] sm:$0x1]
        %v1841 = vperm.slane %v1840, 0
        %v1842 = vmul.f32 %v1736, %v1841
        %v1843 = vmul.f32 %v1739, %v1841
        %v1844 = vmul.f32 %v1841, 0.0
        %v1848 = vrot.slane %v1842, 6
        %v1849 = vrot.slane %v1843, 6
        %v1850 = vsel %vm856, %v1848, %v1849
        %v1851 = vrot.slane %v1844, 6
        %v1852 = vsel %vm856, %v1849, %v1851
        %v1856 = vadd.f32 %v1837, %v1848
        %v1857 = vadd.f32 %v1838, %v1850
        %v1858 = vadd.f32 %v1839, %v1852
        %v1859 = vld [vmem:[%s11 + $0x7] sm:$0x1]
        %v1860 = vperm.slane %v1859, 0
        %v1861 = vmul.f32 %v1736, %v1860
        %v1862 = vmul.f32 %v1739, %v1860
        %v1863 = vmul.f32 %v1860, 0.0
        %v1867 = vrot.slane %v1861, 7
        %v1868 = vrot.slane %v1862, 7
        %v1869 = vsel %vm910, %v1867, %v1868
        %v1870 = vrot.slane %v1863, 7
        %v1871 = vsel %vm910, %v1868, %v1870
        %v1875 = vadd.f32 %v1856, %v1867
        %v1876 = vadd.f32 %v1857, %v1869
        %v1877 = vadd.f32 %v1858, %v1871
        %v1878 = vld [vmem:[%s11 + $0x8] sm:$0x1]
        %v1879 = vperm.slane %v1878, 0
        %v1880 = vmul.f32 %v1736, %v1879
        %v1881 = vmul.f32 %v1739, %v1879
        %v1882 = vmul.f32 %v1879, 0.0
        %v1883 = vadd.f32 %v1875, %v1880
        %v1884 = vadd.f32 %v1876, %v1881
        %v1885 = vadd.f32 %v1877, %v1882
        %v1886 = vld [vmem:[%s11 + $0x9] sm:$0x1]
        %v1887 = vperm.slane %v1886, 0
        %v1888 = vmul.f32 %v1736, %v1887
        %v1889 = vmul.f32 %v1739, %v1887
        %v1890 = vmul.f32 %v1887, 0.0
        %v1894 = vrot.slane %v1888, 1
        %v1895 = vrot.slane %v1889, 1
        %v1896 = vsel %vm586, %v1894, %v1895
        %v1897 = vrot.slane %v1890, 1
        %v1898 = vsel %vm586, %v1895, %v1897
        %v1902 = vadd.f32 %v1883, %v1896
        %v1903 = vadd.f32 %v1884, %v1898
        %v1904 = vadd.f32 %v1885, %v1897
        %v1905 = vld [vmem:[%s11 + $0xa] sm:$0x1]
        %v1906 = vperm.slane %v1905, 0
        %v1907 = vmul.f32 %v1736, %v1906
        %v1908 = vmul.f32 %v1739, %v1906
        %v1909 = vmul.f32 %v1906, 0.0
        %v1913 = vrot.slane %v1907, 2
        %v1914 = vrot.slane %v1908, 2
        %v1915 = vsel %vm640, %v1913, %v1914
        %v1916 = vrot.slane %v1909, 2
        %v1917 = vsel %vm640, %v1914, %v1916
        %v1921 = vadd.f32 %v1902, %v1915
        %v1922 = vadd.f32 %v1903, %v1917
        %v1923 = vadd.f32 %v1904, %v1916
        %v1924 = vld [vmem:[%s12] sm:$0x1]
        %v1926 = vperm.slane %v1924, 0
        %v1928 = vadd.f32 %v1921, %v1926
        %v1929 = vadd.f32 %v1922, %v1926
        %v1930 = vadd.f32 %v1923, %v1926
        %v1931 = vsub.f32 0.0, %v1928
        %v1932 = vsub.f32 0.0, %v1929
        %v1933 = vsub.f32 0.0, %v1930
        %v1934 = vmul.f32 %v1931, 1.442695
        %v1935 = vpow.pop %v1934
        %v1936 = vmul.f32 %v1932, 1.442695
        %v1937 = vpow.pop %v1936
        %v1938 = vmul.f32 %v1933, 1.442695
        %v1939 = vpow.pop %v1938
        %v1940 = vadd.f32 %v1935, 1.0
        %v1941 = vadd.f32 %v1937, 1.0
        %v1942 = vadd.f32 %v1939, 1.0
        %v1943 = vrcp.pop %v1940
        %v1944 = vrcp.pop %v1941
        %v1945 = vrcp.pop %v1942
        %v1949 = vrot.slane %v1943, 3
        %v1950 = vrot.slane %v1944, 3
        %v1951 = vsel %vm694, %v1949, %v1950
        %v1952 = vrot.slane %v1945, 3
        %v1953 = vsel %vm694, %v1950, %v1952
        %v1956 = vmul.f32 %v1736, %v1951
        %v1957 = vmul.f32 %v1739, %v1953
        %v1958 = vsel %vm1660, %v1956, 0.0
        %1959 = vadd.xlane.f32.xlu0 %v1958
        %v1960 = vpop.xlane.xlu0 %1959
        %v1961 = vsel %vm1660, %v1957, 0.0
        %1962 = vadd.xlane.f32.xlu0 %v1961
        %v1963 = vpop.xlane.xlu0 %1962
        %v1964 = vrcp.pop 32.0
        %v1965 = vmul.f32 32.0, %v1964
        %v1966 = vsub.f32 1.0, %v1965
        %v1967 = vmul.f32 %v1964, %v1966
        %v1968 = vadd.f32 %v1964, %v1967
        %vm1969 = vweird.f32 %v1964
        %v1970 = vsel %vm1969, %v1964, %v1968
        %v1971 = vmul.f32 %v1960, %v1970
        %v1972 = vmul.f32 %v1963, %v1970
        %v1973 = vsub.f32 %v1956, %v1971
        %v1974 = vsub.f32 %v1957, %v1972
        %v1975 = vmul.f32 %v1973, %v1973
        %v1976 = vmul.f32 %v1974, %v1974
        %v1977 = vsel %vm1660, %v1975, 0.0
        %1978 = vadd.xlane.f32.xlu0 %v1977
        %v1979 = vpop.xlane.xlu0 %1978
        %v1980 = vsel %vm1660, %v1976, 0.0
        %1981 = vadd.xlane.f32.xlu0 %v1980
        %v1982 = vpop.xlane.xlu0 %1981
        %v1983 = vmul.f32 %v1979, %v1970
        %v1984 = vmul.f32 %v1982, %v1970
        %v1985 = vadd.f32 %v1983, 1e-06
        %v1986 = vadd.f32 %v1984, 1e-06
        %v1987 = vrsqrt.pop %v1985
        %v1988 = vmul.f32 %v1987, %v1985
        %v1989 = vmul.f32 %v1988, %v1987
        %v1990 = vmul.f32 0.5, %v1989
        %v1991 = vsub.f32 1.5, %v1990
        %v1992 = vmul.f32 %v1987, %v1991
        %vm1993 = vweird.f32 %v1985
        %vm1994 = vweird.f32 %v1987
        %vm1995 = vmor %vm1993, %vm1994
        %v1996 = vsel %vm1995, %v1987, %v1992
        %v1997 = vrsqrt.pop %v1986
        %v1998 = vmul.f32 %v1997, %v1986
        %v1999 = vmul.f32 %v1998, %v1997
        %v2000 = vmul.f32 0.5, %v1999
        %v2001 = vsub.f32 1.5, %v2000
        %v2002 = vmul.f32 %v1997, %v2001
        %vm2003 = vweird.f32 %v1986
        %vm2004 = vweird.f32 %v1997
        %vm2005 = vmor %vm2003, %vm2004
        %v2006 = vsel %vm2005, %v1997, %v2002
        %v2007 = vmul.f32 %v1973, %v1996
        %v2008 = vmul.f32 %v1974, %v2006
        %v2009 = vld [vmem:[%s13] sm:$0x1]
        %v2011 = vperm.slane %v2009, 0
        %v2013 = vmul.f32 %v2007, %v2011
        %v2014 = vmul.f32 %v2008, %v2011
        %v2015 = vld [vmem:[%s14] sm:$0x1]
        %v2017 = vperm.slane %v2015, 0
        %v2019 = vadd.f32 %v2013, %v2017
        %v2020 = vadd.f32 %v2014, %v2017
        %2021 = vst.msk [vmem:[%s487] sm:$0xff] %vm1660, %v2019
        %2022 = vst.msk [vmem:[%s487 + $0x8] sm:$0xff] %vm1660, %v2020
        %s2023 = sand.u32 %s357, 1
        %s2024 = scalar_lea.sflag [#allocation3], %s2023
        %s2025 = sand.u32 %s357, 1
        %s2026 = smul.addr %s2025, 16
        %s2027 = scalar_lea.vmem [#allocation2], %s2026
        // Predicated region
        $region81: #{tpu_custom_call.1} parent=79 // pred_check
          %p2028 = pneg %p367
        $region82: #{tpu_custom_call.1} parent=79 // pred_check_branch
          %2030 = sbr.rel (%p2028) target = $region84
        $region83: #{tpu_custom_call.1} parent=79 // pred_region
          %2032 = vsyncadd %s2024, 0
          %s2033 = smul.addr %s29, 2
          %s2034 = smul.addr %s2033, 8
          %s2035 = scalar_lea.hbm %s15, %s2034
          %s2036 = sshll.u32 %s2027, 4
          %s2037 = int_to_ptr.vmem [resolvable:$true] %s2036
          %s2038 = sshll.u32 %s2035, 4
          %s2039 = int_to_ptr.hbm [resolvable:$true] %s2038
          %2044 = dma.vmem_to_hbm [thread:$0]  %s2037, 256, %s2039, %s2024, 128, 128, 8
        $region84: #{tpu_custom_call.1} parent=79 // pred_fallthru
          _
      $region80: #{tpu_custom_call.1} parent=5 // pred_fallthru
        _
      %p2045 = scmp.le.s32.totalorder 2, %s24
      // Predicated region
      $region85: #{tpu_custom_call.1} parent=5 // pred_check
        %p2046 = pneg %p2045
      $region86: #{tpu_custom_call.1} parent=5 // pred_check_branch
        %2048 = sbr.rel (%p2046) target = $region88
      $region87: #{tpu_custom_call.1} parent=5 // pred_region
        %s2049 = ssub.s32 %s24, 2
        // Predicated region
        $region89: #{tpu_custom_call.1} parent=87 // pred_check
          %p2050 = pneg %p373
        $region90: #{tpu_custom_call.1} parent=87 // pred_check_branch
          %2052 = sbr.rel (%p2050) target = $region92
        $region91: #{tpu_custom_call.1} parent=87 // pred_region
          %s2053 = sand.u32 %s358, 1
          %s2054 = scalar_lea.sflag [#allocation3], %s2053
          %s2055 = sand.u32 %s358, 1
          %s2056 = smul.addr %s2055, 16
          %s2057 = scalar_lea.vmem [#allocation2], %s2056
          %2059 = dma.done %s2054, 256
        $region92: #{tpu_custom_call.1} parent=87 // pred_fallthru
          _
      $region88: #{tpu_custom_call.1} parent=5 // pred_fallthru
        _
    $region6: #{tpu_custom_call.1} parent=1 // loop_footer
      %s28 = sadd.s32 1, %s24
    $region7: #{tpu_custom_call.1} parent=1 // loop_footer_branch
      %23 = sbr.rel target = $region3
    $region8: #{tpu_custom_call.1} parent=1 // loop_exit
      _
    %2060 = vsyncpa [#allocation3], 1
    %s2061 = scalar_lea.sflag [#allocation3], 1
    %2062 = vsyncpa %s2061, 1

</llo_original>
